<compile_context>
chip_gen: v5e
topology: v5e:2x2
jax: 0.10.0
libtpu: 0.0.40
codegen_flags: <defaults>
</compile_context>

<pallas_src>
import jax
import jax.numpy as jnp
import numpy as np
from jax.experimental import pallas as pl
from jax.experimental.pallas import tpu as pltpu

LANE = 128


def _round_up(x, m):
    return (x + m - 1) // m * m


def unet_down_kernel(x_ref, w1_ref, b1_ref, w2_ref, b2_ref, o_ref, pad_ref):
    # x_ref:  (B, H, W, Cin_p)        B images per grid step, channels lane-padded
    # w1_ref: (9*Cin_p, Cmid_p)       im2col-flattened HWIO weights
    # b1_ref: (1, Cmid_p)
    # w2_ref: (9*Cmid_p, Cout_p)
    # b2_ref: (1, Cout_p)
    # o_ref:  (B, Hh, Wh, Cout_p)     lane-dense output block
    # pad_ref: VMEM scratch (B, Hh+2, Wh+2, Cmax)  shared zero-padded buffer
    B, H, W, Cin = x_ref.shape
    Hh, Wh = H // 2, W // 2
    Cmid = w1_ref.shape[1]
    Cout = w2_ref.shape[1]

    # Zero the padded scratch once per step; both convs only overwrite the interior,
    # so the 1-pixel halo stays zero (== 'zero' padding).
    pad_ref[...] = jnp.zeros_like(pad_ref)

    # ---- MaxPool2d(2,2): pure VPU maximums, layout-preserving reshapes ----
    x = x_ref[...].astype(jnp.float32)                 # (B, H, W, Cin)
    t = x.reshape(B, Hh, 2, W, Cin)
    a = jnp.maximum(t[:, :, 0], t[:, :, 1])            # (B, Hh, W, Cin)
    t2 = a.reshape(B, Hh, Wh, 2 * Cin)                 # pair adjacent W cols on lanes
    pooled = jnp.maximum(t2[..., :Cin], t2[..., Cin:])  # (B, Hh, Wh, Cin)

    # ---- 3x3 conv (zero pad 1) + bias + ReLU as a single im2col matmul ----
    def conv3x3_bias_relu(inp, w_flat_ref, bias_ref, c_in, c_out):
        # write interior of the padded scratch once; halo rows/cols remain zero
        pad_ref[:, 1:Hh + 1, 1:Wh + 1, :c_in] = inp
        patches = [
            pad_ref[:, dy:dy + Hh, dx:dx + Wh, :c_in]   # (B, Hh, Wh, c_in) per tap
            for dy in range(3) for dx in range(3)
        ]
        # (B, Hh, Wh, 9*c_in) -> (B*Hh*Wh, 9*c_in): one MXU call with K = 9*c_in
        pm = jnp.concatenate(patches, axis=-1).reshape(B * Hh * Wh, 9 * c_in)
        y = jnp.dot(pm, w_flat_ref[...].astype(jnp.float32),
                    preferred_element_type=jnp.float32)
        y = jnp.maximum(y + bias_ref[...].astype(jnp.float32), 0.0)
        return y.reshape(B, Hh, Wh, c_out)

    h1 = conv3x3_bias_relu(pooled, w1_ref, b1_ref, Cin, Cmid)   # conv1 + ReLU
    h2 = conv3x3_bias_relu(h1, w2_ref, b2_ref, Cmid, Cout)      # conv2 + ReLU

    o_ref[...] = h2.astype(o_ref.dtype)


def unet_down(x_nchw, w1, b1, w2, b2, *, target_m=128):
    """x_nchw: (N, Cin, H, W); w*: (3,3,in,out) HWIO; b*: (out,).
    Returns (N, Cout, H//2, W//2) (floor on odd H/W, like nn.MaxPool2d(2,2))."""
    N, Cin, H, W = x_nchw.shape
    Cmid = w1.shape[3]
    Cout = w2.shape[3]

    # floor-crop odd spatial dims (MaxPool2d(2,2) drops the trailing row/col)
    Hh, Wh = H // 2, W // 2
    H2, W2 = 2 * Hh, 2 * Wh
    x_nchw = x_nchw[:, :, :H2, :W2]

    # lane-dense channel padding (zero-pad once in the wrapper)
    Cin_p = _round_up(Cin, LANE)
    Cmid_p = _round_up(Cmid, LANE)
    Cout_p = _round_up(Cout, LANE)
    Cmax = max(Cin_p, Cmid_p)

    x_nhwc = jnp.transpose(x_nchw, (0, 2, 3, 1))
    x_nhwc = jnp.pad(x_nhwc, ((0, 0), (0, 0), (0, 0), (0, Cin_p - Cin)))

    # HWIO -> (9*Cin_p, Cout_p); row order (dy, dx, cin) matches the kernel's patch concat
    w1_p = jnp.pad(w1, ((0, 0), (0, 0), (0, Cin_p - Cin), (0, Cmid_p - Cmid)))
    w1_p = w1_p.reshape(9 * Cin_p, Cmid_p)
    w2_p = jnp.pad(w2, ((0, 0), (0, 0), (0, Cmid_p - Cmid), (0, Cout_p - Cout)))
    w2_p = w2_p.reshape(9 * Cmid_p, Cout_p)
    b1_p = jnp.pad(b1, (0, Cmid_p - Cmid)).reshape(1, Cmid_p)
    b2_p = jnp.pad(b2, (0, Cout_p - Cout)).reshape(1, Cout_p)

    # batch several images per grid step so the matmul M dim (B*Hh*Wh) fills the MXU
    B = max(1, min(N, -(-target_m // max(1, Hh * Wh))))
    Np = _round_up(N, B)
    if Np != N:
        x_nhwc = jnp.pad(x_nhwc, ((0, Np - N), (0, 0), (0, 0), (0, 0)))

    out_nhwc = pl.pallas_call(
        unet_down_kernel,
        out_shape=jax.ShapeDtypeStruct((Np, Hh, Wh, Cout_p), x_nhwc.dtype),
        grid=(Np // B,),
        in_specs=[
            pl.BlockSpec((B, H2, W2, Cin_p), lambda n: (n, 0, 0, 0)),
            pl.BlockSpec((9 * Cin_p, Cmid_p), lambda n: (0, 0)),
            pl.BlockSpec((1, Cmid_p), lambda n: (0, 0)),
            pl.BlockSpec((9 * Cmid_p, Cout_p), lambda n: (0, 0)),
            pl.BlockSpec((1, Cout_p), lambda n: (0, 0)),
        ],
        out_specs=pl.BlockSpec((B, Hh, Wh, Cout_p), lambda n: (n, 0, 0, 0)),
        scratch_shapes=[pltpu.VMEM((B, Hh + 2, Wh + 2, Cmax), jnp.float32)],
        compiler_params=pltpu.CompilerParams(dimension_semantics=("parallel",)),
    )(x_nhwc, w1_p, b1_p, w2_p, b2_p)

    out_nhwc = out_nhwc[:N, :, :, :Cout]              # drop batch + channel padding
    return jnp.transpose(out_nhwc, (0, 3, 1, 2))      # back to NCHW


def reference_forward(x_nchw, w1, b1, w2, b2):
    """Pure-JAX reference mirroring the PyTorch module (NCHW)."""
    p = jax.lax.reduce_window(x_nchw, -jnp.inf, jax.lax.max,
                              (1, 1, 2, 2), (1, 1, 2, 2), "VALID")

    def conv_relu(x, w, b):
        y = jax.lax.conv_general_dilated(
            x, w, window_strides=(1, 1), padding="SAME",
            dimension_numbers=("NCHW", "HWIO", "NCHW"))
        return jnp.maximum(y + b[None, :, None, None], 0.0)

    return conv_relu(conv_relu(p, w1, b1), w2, b2)


if __name__ == "__main__":
    # Small shapes consistent with unetDown(in_size=4, out_size=8): x is (N=2, C=4, H=16, W=16)
    N, Cin, Cout, H, W = 2, 4, 8, 16, 16

    key = jax.random.PRNGKey(0)
    kx, kw1, kb1, kw2, kb2 = jax.random.split(key, 5)

    x = jax.random.normal(kx, (N, Cin, H, W), dtype=jnp.float32)
    # Deterministic synthetic parameters (HWIO layout), matching nn.Conv2d(in,out,3,bias=True) shapes.
    w1 = 0.1 * jax.random.normal(kw1, (3, 3, Cin, Cout), dtype=jnp.float32)
    b1 = 0.1 * jax.random.normal(kb1, (Cout,), dtype=jnp.float32)
    w2 = 0.1 * jax.random.normal(kw2, (3, 3, Cout, Cout), dtype=jnp.float32)
    b2 = 0.1 * jax.random.normal(kb2, (Cout,), dtype=jnp.float32)

    out = jax.block_until_ready(unet_down(x, w1, b1, w2, b2))
    ref = jax.block_until_ready(reference_forward(x, w1, b1, w2, b2))

    assert out.shape == (N, Cout, H // 2, W // 2), out.shape
    np.testing.assert_allclose(np.asarray(out), np.asarray(ref), rtol=1e-4, atol=1e-4)

    print("KERNEL_OK")
</pallas_src>

<mosaic_0001>
module attributes {stable_mosaic.version = 11 : i64} {
  func.func @unet_down_kernel(%arg0: i32, %arg1: memref<2x16x16x128xf32, #tpu.memory_space<vmem>>, %arg2: memref<1152x128xf32, #tpu.memory_space<vmem>>, %arg3: memref<1x128xf32, #tpu.memory_space<vmem>>, %arg4: memref<1152x128xf32, #tpu.memory_space<vmem>>, %arg5: memref<1x128xf32, #tpu.memory_space<vmem>>, %arg6: memref<2x8x8x128xf32, #tpu.memory_space<vmem>>, %arg7: memref<2x10x10x128xf32, #tpu.memory_space<vmem>>) attributes {dimension_semantics = [#tpu.dimension_semantics<parallel>], iteration_bounds = array<i64: 1>, scalar_prefetch = 0 : i64, scratch_operands = 1 : i64, tpu.core_type = #tpu.core_type<tc>, window_params = [{transform_indices = @transform_0, window_bounds = array<i64: 2, 16, 16, 128>}, {pipeline_mode = #tpu.pipeline_mode<synchronous>, transform_indices = @transform_1, window_bounds = array<i64: 1152, 128>}, {pipeline_mode = #tpu.pipeline_mode<synchronous>, transform_indices = @transform_2, window_bounds = array<i64: 1, 128>}, {pipeline_mode = #tpu.pipeline_mode<synchronous>, transform_indices = @transform_3, window_bounds = array<i64: 1152, 128>}, {pipeline_mode = #tpu.pipeline_mode<synchronous>, transform_indices = @transform_4, window_bounds = array<i64: 1, 128>}, {transform_indices = @transform_5, window_bounds = array<i64: 2, 8, 8, 128>}]} {
    %cst = arith.constant 0.000000e+00 : f32
    %0 = vector.broadcast %cst : f32 to vector<2x10x10x128xf32>
    %c0 = arith.constant 0 : index
    %c0_0 = arith.constant 0 : index
    %c0_1 = arith.constant 0 : index
    %c0_2 = arith.constant 0 : index
    %1 = vector.load %arg7[%c0, %c0_0, %c0_1, %c0_2] : memref<2x10x10x128xf32, #tpu.memory_space<vmem>>, vector<2x10x10x128xf32>
    tpu.vector_store %arg7[%c0, %c0_0, %c0_1, %c0_2], %0 {strides = array<i32>} : memref<2x10x10x128xf32, #tpu.memory_space<vmem>>, vector<2x10x10x128xf32>,
    %c0_3 = arith.constant 0 : index
    %c0_4 = arith.constant 0 : index
    %c0_5 = arith.constant 0 : index
    %c0_6 = arith.constant 0 : index
    %2 = vector.load %arg1[%c0_3, %c0_4, %c0_5, %c0_6] : memref<2x16x16x128xf32, #tpu.memory_space<vmem>>, vector<2x16x16x128xf32>
    %3 = vector.shape_cast %2 : vector<2x16x16x128xf32> to vector<2x8x2x16x128xf32>
    %4 = vector.extract_strided_slice %3 {offsets = [0, 0, 0, 0, 0], sizes = [2, 8, 1, 16, 128], strides = [1, 1, 1, 1, 1]} : vector<2x8x2x16x128xf32> to vector<2x8x1x16x128xf32>
    %5 = vector.shape_cast %4 : vector<2x8x1x16x128xf32> to vector<2x8x16x128xf32>
    %6 = vector.extract_strided_slice %3 {offsets = [0, 0, 1, 0, 0], sizes = [2, 8, 1, 16, 128], strides = [1, 1, 1, 1, 1]} : vector<2x8x2x16x128xf32> to vector<2x8x1x16x128xf32>
    %7 = vector.shape_cast %6 : vector<2x8x1x16x128xf32> to vector<2x8x16x128xf32>
    %8 = arith.maximumf %5, %7 : vector<2x8x16x128xf32>
    %9 = vector.shape_cast %8 : vector<2x8x16x128xf32> to vector<2x8x8x256xf32>
    %10 = vector.extract_strided_slice %9 {offsets = [0, 0, 0, 0], sizes = [2, 8, 8, 128], strides = [1, 1, 1, 1]} : vector<2x8x8x256xf32> to vector<2x8x8x128xf32>
    %11 = vector.extract_strided_slice %9 {offsets = [0, 0, 0, 128], sizes = [2, 8, 8, 128], strides = [1, 1, 1, 1]} : vector<2x8x8x256xf32> to vector<2x8x8x128xf32>
    %12 = arith.maximumf %10, %11 : vector<2x8x8x128xf32>
    %c0_7 = arith.constant 0 : index
    %c1 = arith.constant 1 : index
    %c1_8 = arith.constant 1 : index
    %c0_9 = arith.constant 0 : index
    %13 = vector.load %arg7[%c0_7, %c1, %c1_8, %c0_9] : memref<2x10x10x128xf32, #tpu.memory_space<vmem>>, vector<2x8x8x128xf32>
    tpu.vector_store %arg7[%c0_7, %c1, %c1_8, %c0_9], %12 {strides = array<i32>} : memref<2x10x10x128xf32, #tpu.memory_space<vmem>>, vector<2x8x8x128xf32>,
    %c0_10 = arith.constant 0 : index
    %c0_11 = arith.constant 0 : index
    %c0_12 = arith.constant 0 : index
    %c0_13 = arith.constant 0 : index
    %14 = vector.load %arg7[%c0_10, %c0_11, %c0_12, %c0_13] : memref<2x10x10x128xf32, #tpu.memory_space<vmem>>, vector<2x8x8x128xf32>
    %c0_14 = arith.constant 0 : index
    %c0_15 = arith.constant 0 : index
    %c1_16 = arith.constant 1 : index
    %c0_17 = arith.constant 0 : index
    %15 = vector.load %arg7[%c0_14, %c0_15, %c1_16, %c0_17] : memref<2x10x10x128xf32, #tpu.memory_space<vmem>>, vector<2x8x8x128xf32>
    %c0_18 = arith.constant 0 : index
    %c0_19 = arith.constant 0 : index
    %c2 = arith.constant 2 : index
    %c0_20 = arith.constant 0 : index
    %16 = vector.load %arg7[%c0_18, %c0_19, %c2, %c0_20] : memref<2x10x10x128xf32, #tpu.memory_space<vmem>>, vector<2x8x8x128xf32>
    %c0_21 = arith.constant 0 : index
    %c1_22 = arith.constant 1 : index
    %c0_23 = arith.constant 0 : index
    %c0_24 = arith.constant 0 : index
    %17 = vector.load %arg7[%c0_21, %c1_22, %c0_23, %c0_24] : memref<2x10x10x128xf32, #tpu.memory_space<vmem>>, vector<2x8x8x128xf32>
    %c0_25 = arith.constant 0 : index
    %c1_26 = arith.constant 1 : index
    %c1_27 = arith.constant 1 : index
    %c0_28 = arith.constant 0 : index
    %18 = vector.load %arg7[%c0_25, %c1_26, %c1_27, %c0_28] : memref<2x10x10x128xf32, #tpu.memory_space<vmem>>, vector<2x8x8x128xf32>
    %c0_29 = arith.constant 0 : index
    %c1_30 = arith.constant 1 : index
    %c2_31 = arith.constant 2 : index
    %c0_32 = arith.constant 0 : index
    %19 = vector.load %arg7[%c0_29, %c1_30, %c2_31, %c0_32] : memref<2x10x10x128xf32, #tpu.memory_space<vmem>>, vector<2x8x8x128xf32>
    %c0_33 = arith.constant 0 : index
    %c2_34 = arith.constant 2 : index
    %c0_35 = arith.constant 0 : index
    %c0_36 = arith.constant 0 : index
    %20 = vector.load %arg7[%c0_33, %c2_34, %c0_35, %c0_36] : memref<2x10x10x128xf32, #tpu.memory_space<vmem>>, vector<2x8x8x128xf32>
    %c0_37 = arith.constant 0 : index
    %c2_38 = arith.constant 2 : index
    %c1_39 = arith.constant 1 : index
    %c0_40 = arith.constant 0 : index
    %21 = vector.load %arg7[%c0_37, %c2_38, %c1_39, %c0_40] : memref<2x10x10x128xf32, #tpu.memory_space<vmem>>, vector<2x8x8x128xf32>
    %c0_41 = arith.constant 0 : index
    %c2_42 = arith.constant 2 : index
    %c2_43 = arith.constant 2 : index
    %c0_44 = arith.constant 0 : index
    %22 = vector.load %arg7[%c0_41, %c2_42, %c2_43, %c0_44] : memref<2x10x10x128xf32, #tpu.memory_space<vmem>>, vector<2x8x8x128xf32>
    %23 = tpu.concatenate %14, %15, %16, %17, %18, %19, %20, %21, %22 in 3 : vector<2x8x8x128xf32>, vector<2x8x8x128xf32>, vector<2x8x8x128xf32>, vector<2x8x8x128xf32>, vector<2x8x8x128xf32>, vector<2x8x8x128xf32>, vector<2x8x8x128xf32>, vector<2x8x8x128xf32>, vector<2x8x8x128xf32> -> vector<2x8x8x1152xf32>
    %24 = vector.shape_cast %23 : vector<2x8x8x1152xf32> to vector<128x1152xf32>
    %c0_45 = arith.constant 0 : index
    %c0_46 = arith.constant 0 : index
    %25 = vector.load %arg2[%c0_45, %c0_46] : memref<1152x128xf32, #tpu.memory_space<vmem>>, vector<1152x128xf32>
    %cst_47 = arith.constant dense<0.000000e+00> : vector<128x128xf32>
    %26 = tpu.matmul %24, %25, %cst_47 {dimension_numbers = #tpu.dot_dimension_numbers<[1], [0], [0], [1], [0, 0, 1, 1], [], []>} : vector<128x1152xf32>, vector<1152x128xf32>, vector<128x128xf32> -> vector<128x128xf32>
    %c0_48 = arith.constant 0 : index
    %c0_49 = arith.constant 0 : index
    %27 = vector.load %arg3[%c0_48, %c0_49] : memref<1x128xf32, #tpu.memory_space<vmem>>, vector<1x128xf32>
    %28 = vector.broadcast %27 : vector<1x128xf32> to vector<128x128xf32>
    %29 = arith.addf %26, %28 : vector<128x128xf32>
    %cst_50 = arith.constant 0.000000e+00 : f32
    %30 = vector.broadcast %cst_50 : f32 to vector<128x128xf32>
    %31 = arith.maximumf %29, %30 : vector<128x128xf32>
    %32 = vector.shape_cast %31 : vector<128x128xf32> to vector<2x8x8x128xf32>
    %c0_51 = arith.constant 0 : index
    %c1_52 = arith.constant 1 : index
    %c1_53 = arith.constant 1 : index
    %c0_54 = arith.constant 0 : index
    %33 = vector.load %arg7[%c0_51, %c1_52, %c1_53, %c0_54] : memref<2x10x10x128xf32, #tpu.memory_space<vmem>>, vector<2x8x8x128xf32>
    tpu.vector_store %arg7[%c0_51, %c1_52, %c1_53, %c0_54], %32 {strides = array<i32>} : memref<2x10x10x128xf32, #tpu.memory_space<vmem>>, vector<2x8x8x128xf32>,
    %c0_55 = arith.constant 0 : index
    %c0_56 = arith.constant 0 : index
    %c0_57 = arith.constant 0 : index
    %c0_58 = arith.constant 0 : index
    %34 = vector.load %arg7[%c0_55, %c0_56, %c0_57, %c0_58] : memref<2x10x10x128xf32, #tpu.memory_space<vmem>>, vector<2x8x8x128xf32>
    %c0_59 = arith.constant 0 : index
    %c0_60 = arith.constant 0 : index
    %c1_61 = arith.constant 1 : index
    %c0_62 = arith.constant 0 : index
    %35 = vector.load %arg7[%c0_59, %c0_60, %c1_61, %c0_62] : memref<2x10x10x128xf32, #tpu.memory_space<vmem>>, vector<2x8x8x128xf32>
    %c0_63 = arith.constant 0 : index
    %c0_64 = arith.constant 0 : index
    %c2_65 = arith.constant 2 : index
    %c0_66 = arith.constant 0 : index
    %36 = vector.load %arg7[%c0_63, %c0_64, %c2_65, %c0_66] : memref<2x10x10x128xf32, #tpu.memory_space<vmem>>, vector<2x8x8x128xf32>
    %c0_67 = arith.constant 0 : index
    %c1_68 = arith.constant 1 : index
    %c0_69 = arith.constant 0 : index
    %c0_70 = arith.constant 0 : index
    %37 = vector.load %arg7[%c0_67, %c1_68, %c0_69, %c0_70] : memref<2x10x10x128xf32, #tpu.memory_space<vmem>>, vector<2x8x8x128xf32>
    %c0_71 = arith.constant 0 : index
    %c1_72 = arith.constant 1 : index
    %c1_73 = arith.constant 1 : index
    %c0_74 = arith.constant 0 : index
    %38 = vector.load %arg7[%c0_71, %c1_72, %c1_73, %c0_74] : memref<2x10x10x128xf32, #tpu.memory_space<vmem>>, vector<2x8x8x128xf32>
    %c0_75 = arith.constant 0 : index
    %c1_76 = arith.constant 1 : index
    %c2_77 = arith.constant 2 : index
    %c0_78 = arith.constant 0 : index
    %39 = vector.load %arg7[%c0_75, %c1_76, %c2_77, %c0_78] : memref<2x10x10x128xf32, #tpu.memory_space<vmem>>, vector<2x8x8x128xf32>
    %c0_79 = arith.constant 0 : index
    %c2_80 = arith.constant 2 : index
    %c0_81 = arith.constant 0 : index
    %c0_82 = arith.constant 0 : index
    %40 = vector.load %arg7[%c0_79, %c2_80, %c0_81, %c0_82] : memref<2x10x10x128xf32, #tpu.memory_space<vmem>>, vector<2x8x8x128xf32>
    %c0_83 = arith.constant 0 : index
    %c2_84 = arith.constant 2 : index
    %c1_85 = arith.constant 1 : index
    %c0_86 = arith.constant 0 : index
    %41 = vector.load %arg7[%c0_83, %c2_84, %c1_85, %c0_86] : memref<2x10x10x128xf32, #tpu.memory_space<vmem>>, vector<2x8x8x128xf32>
    %c0_87 = arith.constant 0 : index
    %c2_88 = arith.constant 2 : index
    %c2_89 = arith.constant 2 : index
    %c0_90 = arith.constant 0 : index
    %42 = vector.load %arg7[%c0_87, %c2_88, %c2_89, %c0_90] : memref<2x10x10x128xf32, #tpu.memory_space<vmem>>, vector<2x8x8x128xf32>
    %43 = tpu.concatenate %34, %35, %36, %37, %38, %39, %40, %41, %42 in 3 : vector<2x8x8x128xf32>, vector<2x8x8x128xf32>, vector<2x8x8x128xf32>, vector<2x8x8x128xf32>, vector<2x8x8x128xf32>, vector<2x8x8x128xf32>, vector<2x8x8x128xf32>, vector<2x8x8x128xf32>, vector<2x8x8x128xf32> -> vector<2x8x8x1152xf32>
    %44 = vector.shape_cast %43 : vector<2x8x8x1152xf32> to vector<128x1152xf32>
    %c0_91 = arith.constant 0 : index
    %c0_92 = arith.constant 0 : index
    %45 = vector.load %arg4[%c0_91, %c0_92] : memref<1152x128xf32, #tpu.memory_space<vmem>>, vector<1152x128xf32>
    %cst_93 = arith.constant dense<0.000000e+00> : vector<128x128xf32>
    %46 = tpu.matmul %44, %45, %cst_93 {dimension_numbers = #tpu.dot_dimension_numbers<[1], [0], [0], [1], [0, 0, 1, 1], [], []>} : vector<128x1152xf32>, vector<1152x128xf32>, vector<128x128xf32> -> vector<128x128xf32>
    %c0_94 = arith.constant 0 : index
    %c0_95 = arith.constant 0 : index
    %47 = vector.load %arg5[%c0_94, %c0_95] : memref<1x128xf32, #tpu.memory_space<vmem>>, vector<1x128xf32>
    %48 = vector.broadcast %47 : vector<1x128xf32> to vector<128x128xf32>
    %49 = arith.addf %46, %48 : vector<128x128xf32>
    %cst_96 = arith.constant 0.000000e+00 : f32
    %50 = vector.broadcast %cst_96 : f32 to vector<128x128xf32>
    %51 = arith.maximumf %49, %50 : vector<128x128xf32>
    %52 = vector.shape_cast %51 : vector<128x128xf32> to vector<2x8x8x128xf32>
    %c0_97 = arith.constant 0 : index
    %c0_98 = arith.constant 0 : index
    %c0_99 = arith.constant 0 : index
    %c0_100 = arith.constant 0 : index
    %53 = vector.load %arg6[%c0_97, %c0_98, %c0_99, %c0_100] : memref<2x8x8x128xf32, #tpu.memory_space<vmem>>, vector<2x8x8x128xf32>
    tpu.vector_store %arg6[%c0_97, %c0_98, %c0_99, %c0_100], %52 {strides = array<i32>} : memref<2x8x8x128xf32, #tpu.memory_space<vmem>>, vector<2x8x8x128xf32>,
    return
  }
  func.func @transform_0(%arg0: i32) -> (i32, i32, i32, i32) {
    %c0_i32 = arith.constant 0 : i32
    %c0_i32_0 = arith.constant 0 : i32
    %c0_i32_1 = arith.constant 0 : i32
    %c0_i32_2 = arith.constant 0 : i32
    return %arg0, %c0_i32, %c0_i32_0, %c0_i32_1 : i32, i32, i32, i32
  }
  func.func @transform_1(%arg0: i32) -> (i32, i32) {
    %c0_i32 = arith.constant 0 : i32
    %c0_i32_0 = arith.constant 0 : i32
    %c0_i32_1 = arith.constant 0 : i32
    return %c0_i32, %c0_i32_0 : i32, i32
  }
  func.func @transform_2(%arg0: i32) -> (i32, i32) {
    %c0_i32 = arith.constant 0 : i32
    %c0_i32_0 = arith.constant 0 : i32
    %c0_i32_1 = arith.constant 0 : i32
    return %c0_i32, %c0_i32_0 : i32, i32
  }
  func.func @transform_3(%arg0: i32) -> (i32, i32) {
    %c0_i32 = arith.constant 0 : i32
    %c0_i32_0 = arith.constant 0 : i32
    %c0_i32_1 = arith.constant 0 : i32
    return %c0_i32, %c0_i32_0 : i32, i32
  }
  func.func @transform_4(%arg0: i32) -> (i32, i32) {
    %c0_i32 = arith.constant 0 : i32
    %c0_i32_0 = arith.constant 0 : i32
    %c0_i32_1 = arith.constant 0 : i32
    return %c0_i32, %c0_i32_0 : i32, i32
  }
  func.func @transform_5(%arg0: i32) -> (i32, i32, i32, i32) {
    %c0_i32 = arith.constant 0 : i32
    %c0_i32_0 = arith.constant 0 : i32
    %c0_i32_1 = arith.constant 0 : i32
    %c0_i32_2 = arith.constant 0 : i32
    return %arg0, %c0_i32, %c0_i32_0, %c0_i32_1 : i32, i32, i32, i32
  }
}

</mosaic_0001>

<llo_original>
// kernel: tpu_custom_call.1
$region0: #{tpu_custom_call.1}
  #allocation0 [shape = 'u32[]', space=smem, size = 0x4, offset = 0x4, fixed_abs, tag = 'smem constant byte address 0x4 - core index']
  #allocation1 [shape = 'u32[72,128]{1,0:T(1,128)}', space=vmem, size = 0x9000, scoped, tag = 'internal scratch']
  #allocation2 [shape = 'f32[2,10,10,128]{3,2,1,0:T(8,128)}', space=vmem, size = 0x28000, scoped, tag = 'scratch operand']
  %s0 = inlined_call_operand.hbm [shape: f32[2,16,16,128], index: 0, kind: input, shape index: {}]
  %s1 = inlined_call_operand.hbm [shape: f32[1152,128], index: 1, kind: input, shape index: {}]
  %s2 = inlined_call_operand.vmem [shape: f32[1,128], index: 2, kind: input, shape index: {}]
  %s3 = inlined_call_operand.hbm [shape: f32[1152,128], index: 3, kind: input, shape index: {}]
  %s4 = inlined_call_operand.vmem [shape: f32[1,128], index: 4, kind: input, shape index: {}]
  %s5 = inlined_call_operand.hbm [shape: f32[2,8,8,128], index: 5, kind: output, shape index: {}]
  %s6 = sld [smem:[#allocation0]]
  $region42: #{tpu_custom_call.1} parent=0
    _
  %s8 = ssub.s32 1, %s6
  %s9 = scalar_select 0, %s8, %s6
  $region1: #{tpu_custom_call.1} parent=0
    #allocation3 [shape = 'u8[262144]{0}', space=vmem, size = 0x40000, scoped, tag = 'input window, operand 0, single buffered']
    #allocation4 [shape = 's32[1]{0}', space=sflag, size = 0x4, scoped, tag = 'scoped memory for tpu_custom_call.1']
    #allocation5 [shape = 's32[1]{0}', space=sflag, size = 0x4, scoped, tag = 'scoped memory for tpu_custom_call.1']
    #allocation6 [shape = 'u8[589824]{0}', space=vmem, size = 0x90000, scoped, tag = 'input window, operand 1, single buffered']
    #allocation7 [shape = 's32[1]{0}', space=sflag, size = 0x4, scoped, tag = 'scoped memory for tpu_custom_call.1']
    #allocation8 [shape = 'u8[589824]{0}', space=vmem, size = 0x90000, scoped, tag = 'input window, operand 3, single buffered']
    #allocation9 [shape = 'u8[65536]{0}', space=vmem, size = 0x10000, scoped, tag = 'output window, operand 0, single buffered']
    %10 = vsyncpa [#allocation4], 0
    %11 = vsyncpa [#allocation7], 0
    %12 = vsyncpa [#allocation5], 0
    // Predicated region
    $region2: #{tpu_custom_call.1} parent=1 // pred_check
      _
    $region3: #{tpu_custom_call.1} parent=1 // pred_check_branch
      %14 = sbr.rel (0) target = $region5
    $region4: #{tpu_custom_call.1} parent=1 // pred_region
      %16 = vsyncadd [#allocation4], 0
      %s17 = sshll.u32 %s0, 4
      %s18 = int_to_ptr.hbm [resolvable:$true] %s17
      %s19 = sshll.u32 [#allocation3], 4
      %s20 = int_to_ptr.vmem [resolvable:$true] %s19
      %25 = dma.hbm_to_vmem [thread:$0]  %s18, 8192, %s20, [#allocation4], 128, 128, 8
    $region5: #{tpu_custom_call.1} parent=1 // pred_fallthru
      _
    // Predicated region
    $region6: #{tpu_custom_call.1} parent=1 // pred_check
      _
    $region7: #{tpu_custom_call.1} parent=1 // pred_check_branch
      %27 = sbr.rel (0) target = $region9
    $region8: #{tpu_custom_call.1} parent=1 // pred_region
      %29 = vsyncadd [#allocation7], 0
      %s30 = sshll.u32 %s1, 4
      %s31 = int_to_ptr.hbm [resolvable:$true] %s30
      %s32 = sshll.u32 [#allocation6], 4
      %s33 = int_to_ptr.vmem [resolvable:$true] %s32
      %38 = dma.hbm_to_vmem [thread:$0]  %s31, 18432, %s33, [#allocation7], 128, 128, 8
    $region9: #{tpu_custom_call.1} parent=1 // pred_fallthru
      _
    // Predicated region
    $region10: #{tpu_custom_call.1} parent=1 // pred_check
      _
    $region11: #{tpu_custom_call.1} parent=1 // pred_check_branch
      %40 = sbr.rel (0) target = $region13
    $region12: #{tpu_custom_call.1} parent=1 // pred_region
      _
    $region13: #{tpu_custom_call.1} parent=1 // pred_fallthru
      _
    // Predicated region
    $region14: #{tpu_custom_call.1} parent=1 // pred_check
      _
    $region15: #{tpu_custom_call.1} parent=1 // pred_check_branch
      %42 = sbr.rel (0) target = $region17
    $region16: #{tpu_custom_call.1} parent=1 // pred_region
      %44 = vsyncadd [#allocation7], 0
      %s45 = sshll.u32 %s3, 4
      %s46 = int_to_ptr.hbm [resolvable:$true] %s45
      %s47 = sshll.u32 [#allocation8], 4
      %s48 = int_to_ptr.vmem [resolvable:$true] %s47
      %53 = dma.hbm_to_vmem [thread:$0]  %s46, 18432, %s48, [#allocation7], 128, 128, 8
    $region17: #{tpu_custom_call.1} parent=1 // pred_fallthru
      _
    // Predicated region
    $region18: #{tpu_custom_call.1} parent=1 // pred_check
      _
    $region19: #{tpu_custom_call.1} parent=1 // pred_check_branch
      %55 = sbr.rel (0) target = $region21
    $region20: #{tpu_custom_call.1} parent=1 // pred_region
      _
    $region21: #{tpu_custom_call.1} parent=1 // pred_fallthru
      _
    // Predicated region
    $region22: #{tpu_custom_call.1} parent=1 // pred_check
      _
    $region23: #{tpu_custom_call.1} parent=1 // pred_check_branch
      %57 = sbr.rel (0) target = $region25
    $region24: #{tpu_custom_call.1} parent=1 // pred_region
      %59 = dma.done [#allocation4], 8192
    $region25: #{tpu_custom_call.1} parent=1 // pred_fallthru
      _
    // Predicated region
    $region26: #{tpu_custom_call.1} parent=1 // pred_check
      _
    $region27: #{tpu_custom_call.1} parent=1 // pred_check_branch
      %61 = sbr.rel (0) target = $region29
    $region28: #{tpu_custom_call.1} parent=1 // pred_region
      %63 = dma.done [#allocation7], 18432
    $region29: #{tpu_custom_call.1} parent=1 // pred_fallthru
      _
    // Predicated region
    $region30: #{tpu_custom_call.1} parent=1 // pred_check
      _
    $region31: #{tpu_custom_call.1} parent=1 // pred_check_branch
      %65 = sbr.rel (0) target = $region33
    $region32: #{tpu_custom_call.1} parent=1 // pred_region
      %67 = dma.done [#allocation7], 18432
    $region33: #{tpu_custom_call.1} parent=1 // pred_fallthru
      _
    %68 = vst [vmem:[#allocation2] sm:$0xff] 0.0
    %69 = vst [vmem:[#allocation2 + $0x8] sm:$0x3] 0.0
    %70 = vst [vmem:[#allocation2 + $0x10] sm:$0xff] 0.0
    %71 = vst [vmem:[#allocation2 + $0x18] sm:$0x3] 0.0
    %72 = vst [vmem:[#allocation2 + $0x20] sm:$0xff] 0.0
    %73 = vst [vmem:[#allocation2 + $0x28] sm:$0x3] 0.0
    %74 = vst [vmem:[#allocation2 + $0x30] sm:$0xff] 0.0
    %75 = vst [vmem:[#allocation2 + $0x38] sm:$0x3] 0.0
    %76 = vst [vmem:[#allocation2 + $0x40] sm:$0xff] 0.0
    %77 = vst [vmem:[#allocation2 + $0x48] sm:$0x3] 0.0
    %78 = vst [vmem:[#allocation2 + $0x50] sm:$0xff] 0.0
    %79 = vst [vmem:[#allocation2 + $0x58] sm:$0x3] 0.0
    %80 = vst [vmem:[#allocation2 + $0x60] sm:$0xff] 0.0
    %81 = vst [vmem:[#allocation2 + $0x68] sm:$0x3] 0.0
    %82 = vst [vmem:[#allocation2 + $0x70] sm:$0xff] 0.0
    %83 = vst [vmem:[#allocation2 + $0x78] sm:$0x3] 0.0
    %84 = vst [vmem:[#allocation2 + $0x80] sm:$0xff] 0.0
    %85 = vst [vmem:[#allocation2 + $0x88] sm:$0x3] 0.0
    %86 = vst [vmem:[#allocation2 + $0x90] sm:$0xff] 0.0
    %87 = vst [vmem:[#allocation2 + $0x98] sm:$0x3] 0.0
    %88 = vst [vmem:[#allocation2 + $0xa0] sm:$0xff] 0.0
    %89 = vst [vmem:[#allocation2 + $0xa8] sm:$0x3] 0.0
    %90 = vst [vmem:[#allocation2 + $0xb0] sm:$0xff] 0.0
    %91 = vst [vmem:[#allocation2 + $0xb8] sm:$0x3] 0.0
    %92 = vst [vmem:[#allocation2 + $0xc0] sm:$0xff] 0.0
    %93 = vst [vmem:[#allocation2 + $0xc8] sm:$0x3] 0.0
    %94 = vst [vmem:[#allocation2 + $0xd0] sm:$0xff] 0.0
    %95 = vst [vmem:[#allocation2 + $0xd8] sm:$0x3] 0.0
    %96 = vst [vmem:[#allocation2 + $0xe0] sm:$0xff] 0.0
    %97 = vst [vmem:[#allocation2 + $0xe8] sm:$0x3] 0.0
    %98 = vst [vmem:[#allocation2 + $0xf0] sm:$0xff] 0.0
    %99 = vst [vmem:[#allocation2 + $0xf8] sm:$0x3] 0.0
    %100 = vst [vmem:[#allocation2 + $0x100] sm:$0xff] 0.0
    %101 = vst [vmem:[#allocation2 + $0x108] sm:$0x3] 0.0
    %102 = vst [vmem:[#allocation2 + $0x110] sm:$0xff] 0.0
    %103 = vst [vmem:[#allocation2 + $0x118] sm:$0x3] 0.0
    %104 = vst [vmem:[#allocation2 + $0x120] sm:$0xff] 0.0
    %105 = vst [vmem:[#allocation2 + $0x128] sm:$0x3] 0.0
    %106 = vst [vmem:[#allocation2 + $0x130] sm:$0xff] 0.0
    %107 = vst [vmem:[#allocation2 + $0x138] sm:$0x3] 0.0
    %v108 = vld [vmem:[#allocation3] sm:$0xff]
    %v109 = vld [vmem:[#allocation3 + $0x8] sm:$0xff]
    %v110 = vld [vmem:[#allocation3 + $0x10] sm:$0xff]
    %v111 = vld [vmem:[#allocation3 + $0x18] sm:$0xff]
    %v112 = vld [vmem:[#allocation3 + $0x20] sm:$0xff]
    %v113 = vld [vmem:[#allocation3 + $0x28] sm:$0xff]
    %v114 = vld [vmem:[#allocation3 + $0x30] sm:$0xff]
    %v115 = vld [vmem:[#allocation3 + $0x38] sm:$0xff]
    %v116 = vld [vmem:[#allocation3 + $0x40] sm:$0xff]
    %v117 = vld [vmem:[#allocation3 + $0x48] sm:$0xff]
    %v118 = vld [vmem:[#allocation3 + $0x50] sm:$0xff]
    %v119 = vld [vmem:[#allocation3 + $0x58] sm:$0xff]
    %v120 = vld [vmem:[#allocation3 + $0x60] sm:$0xff]
    %v121 = vld [vmem:[#allocation3 + $0x68] sm:$0xff]
    %v122 = vld [vmem:[#allocation3 + $0x70] sm:$0xff]
    %v123 = vld [vmem:[#allocation3 + $0x78] sm:$0xff]
    %v124 = vld [vmem:[#allocation3 + $0x80] sm:$0xff]
    %v125 = vld [vmem:[#allocation3 + $0x88] sm:$0xff]
    %v126 = vld [vmem:[#allocation3 + $0x90] sm:$0xff]
    %v127 = vld [vmem:[#allocation3 + $0x98] sm:$0xff]
    %v128 = vld [vmem:[#allocation3 + $0xa0] sm:$0xff]
    %v129 = vld [vmem:[#allocation3 + $0xa8] sm:$0xff]
    %v130 = vld [vmem:[#allocation3 + $0xb0] sm:$0xff]
    %v131 = vld [vmem:[#allocation3 + $0xb8] sm:$0xff]
    %v132 = vld [vmem:[#allocation3 + $0xc0] sm:$0xff]
    %v133 = vld [vmem:[#allocation3 + $0xc8] sm:$0xff]
    %v134 = vld [vmem:[#allocation3 + $0xd0] sm:$0xff]
    %v135 = vld [vmem:[#allocation3 + $0xd8] sm:$0xff]
    %v136 = vld [vmem:[#allocation3 + $0xe0] sm:$0xff]
    %v137 = vld [vmem:[#allocation3 + $0xe8] sm:$0xff]
    %v138 = vld [vmem:[#allocation3 + $0xf0] sm:$0xff]
    %v139 = vld [vmem:[#allocation3 + $0xf8] sm:$0xff]
    %v140 = vld [vmem:[#allocation3 + $0x100] sm:$0xff]
    %v141 = vld [vmem:[#allocation3 + $0x108] sm:$0xff]
    %v142 = vld [vmem:[#allocation3 + $0x110] sm:$0xff]
    %v143 = vld [vmem:[#allocation3 + $0x118] sm:$0xff]
    %v144 = vld [vmem:[#allocation3 + $0x120] sm:$0xff]
    %v145 = vld [vmem:[#allocation3 + $0x128] sm:$0xff]
    %v146 = vld [vmem:[#allocation3 + $0x130] sm:$0xff]
    %v147 = vld [vmem:[#allocation3 + $0x138] sm:$0xff]
    %v148 = vld [vmem:[#allocation3 + $0x140] sm:$0xff]
    %v149 = vld [vmem:[#allocation3 + $0x148] sm:$0xff]
    %v150 = vld [vmem:[#allocation3 + $0x150] sm:$0xff]
    %v151 = vld [vmem:[#allocation3 + $0x158] sm:$0xff]
    %v152 = vld [vmem:[#allocation3 + $0x160] sm:$0xff]
    %v153 = vld [vmem:[#allocation3 + $0x168] sm:$0xff]
    %v154 = vld [vmem:[#allocation3 + $0x170] sm:$0xff]
    %v155 = vld [vmem:[#allocation3 + $0x178] sm:$0xff]
    %v156 = vld [vmem:[#allocation3 + $0x180] sm:$0xff]
    %v157 = vld [vmem:[#allocation3 + $0x188] sm:$0xff]
    %v158 = vld [vmem:[#allocation3 + $0x190] sm:$0xff]
    %v159 = vld [vmem:[#allocation3 + $0x198] sm:$0xff]
    %v160 = vld [vmem:[#allocation3 + $0x1a0] sm:$0xff]
    %v161 = vld [vmem:[#allocation3 + $0x1a8] sm:$0xff]
    %v162 = vld [vmem:[#allocation3 + $0x1b0] sm:$0xff]
    %v163 = vld [vmem:[#allocation3 + $0x1b8] sm:$0xff]
    %v164 = vld [vmem:[#allocation3 + $0x1c0] sm:$0xff]
    %v165 = vld [vmem:[#allocation3 + $0x1c8] sm:$0xff]
    %v166 = vld [vmem:[#allocation3 + $0x1d0] sm:$0xff]
    %v167 = vld [vmem:[#allocation3 + $0x1d8] sm:$0xff]
    %v168 = vld [vmem:[#allocation3 + $0x1e0] sm:$0xff]
    %v169 = vld [vmem:[#allocation3 + $0x1e8] sm:$0xff]
    %v170 = vld [vmem:[#allocation3 + $0x1f0] sm:$0xff]
    %v171 = vld [vmem:[#allocation3 + $0x1f8] sm:$0xff]
    %v172 = vmax.f32 %v108, %v110
    %v173 = vmax.f32 %v109, %v111
    %v174 = vmax.f32 %v112, %v114
    %v175 = vmax.f32 %v113, %v115
    %v176 = vmax.f32 %v116, %v118
    %v177 = vmax.f32 %v117, %v119
    %v178 = vmax.f32 %v120, %v122
    %v179 = vmax.f32 %v121, %v123
    %v180 = vmax.f32 %v124, %v126
    %v181 = vmax.f32 %v125, %v127
    %v182 = vmax.f32 %v128, %v130
    %v183 = vmax.f32 %v129, %v131
    %v184 = vmax.f32 %v132, %v134
    %v185 = vmax.f32 %v133, %v135
    %v186 = vmax.f32 %v136, %v138
    %v187 = vmax.f32 %v137, %v139
    %v188 = vmax.f32 %v140, %v142
    %v189 = vmax.f32 %v141, %v143
    %v190 = vmax.f32 %v144, %v146
    %v191 = vmax.f32 %v145, %v147
    %v192 = vmax.f32 %v148, %v150
    %v193 = vmax.f32 %v149, %v151
    %v194 = vmax.f32 %v152, %v154
    %v195 = vmax.f32 %v153, %v155
    %v196 = vmax.f32 %v156, %v158
    %v197 = vmax.f32 %v157, %v159
    %v198 = vmax.f32 %v160, %v162
    %v199 = vmax.f32 %v161, %v163
    %v200 = vmax.f32 %v164, %v166
    %v201 = vmax.f32 %v165, %v167
    %v202 = vmax.f32 %v168, %v170
    %v203 = vmax.f32 %v169, %v171
    %v205 = vunpack.c.l.s4 1966171168
    %v206 = vunpack.c.0.s8 %v205
    %v207 = vperm.slane %v172, %v206
    %v209 = vunpack.c.l.s4 1966171168
    %v210 = vunpack.c.0.s8 %v209
    %v211 = vperm.slane %v173, %v210
    %v213 = vunpack.c.l.s4 1966171168
    %v214 = vunpack.c.0.s8 %v213
    %v215 = vperm.slane %v174, %v214
    %v217 = vunpack.c.l.s4 1966171168
    %v218 = vunpack.c.0.s8 %v217
    %v219 = vperm.slane %v175, %v218
    %v221 = vunpack.c.l.s4 1966171168
    %v222 = vunpack.c.0.s8 %v221
    %v223 = vperm.slane %v176, %v222
    %v225 = vunpack.c.l.s4 1966171168
    %v226 = vunpack.c.0.s8 %v225
    %v227 = vperm.slane %v177, %v226
    %v229 = vunpack.c.l.s4 1966171168
    %v230 = vunpack.c.0.s8 %v229
    %v231 = vperm.slane %v178, %v230
    %v233 = vunpack.c.l.s4 1966171168
    %v234 = vunpack.c.0.s8 %v233
    %v235 = vperm.slane %v179, %v234
    %v237 = vunpack.c.l.s4 1966171168
    %v238 = vunpack.c.0.s8 %v237
    %v239 = vperm.slane %v180, %v238
    %v241 = vunpack.c.l.s4 1966171168
    %v242 = vunpack.c.0.s8 %v241
    %v243 = vperm.slane %v181, %v242
    %v245 = vunpack.c.l.s4 1966171168
    %v246 = vunpack.c.0.s8 %v245
    %v247 = vperm.slane %v182, %v246
    %v249 = vunpack.c.l.s4 1966171168
    %v250 = vunpack.c.0.s8 %v249
    %v251 = vperm.slane %v183, %v250
    %v253 = vunpack.c.l.s4 1966171168
    %v254 = vunpack.c.0.s8 %v253
    %v255 = vperm.slane %v184, %v254
    %v257 = vunpack.c.l.s4 1966171168
    %v258 = vunpack.c.0.s8 %v257
    %v259 = vperm.slane %v185, %v258
    %v261 = vunpack.c.l.s4 1966171168
    %v262 = vunpack.c.0.s8 %v261
    %v263 = vperm.slane %v186, %v262
    %v265 = vunpack.c.l.s4 1966171168
    %v266 = vunpack.c.0.s8 %v265
    %v267 = vperm.slane %v187, %v266
    %v269 = vunpack.c.l.s4 1966171168
    %v270 = vunpack.c.0.s8 %v269
    %v271 = vperm.slane %v188, %v270
    %v273 = vunpack.c.l.s4 1966171168
    %v274 = vunpack.c.0.s8 %v273
    %v275 = vperm.slane %v189, %v274
    %v277 = vunpack.c.l.s4 1966171168
    %v278 = vunpack.c.0.s8 %v277
    %v279 = vperm.slane %v190, %v278
    %v281 = vunpack.c.l.s4 1966171168
    %v282 = vunpack.c.0.s8 %v281
    %v283 = vperm.slane %v191, %v282
    %v285 = vunpack.c.l.s4 1966171168
    %v286 = vunpack.c.0.s8 %v285
    %v287 = vperm.slane %v192, %v286
    %v289 = vunpack.c.l.s4 1966171168
    %v290 = vunpack.c.0.s8 %v289
    %v291 = vperm.slane %v193, %v290
    %v293 = vunpack.c.l.s4 1966171168
    %v294 = vunpack.c.0.s8 %v293
    %v295 = vperm.slane %v194, %v294
    %v297 = vunpack.c.l.s4 1966171168
    %v298 = vunpack.c.0.s8 %v297
    %v299 = vperm.slane %v195, %v298
    %v301 = vunpack.c.l.s4 1966171168
    %v302 = vunpack.c.0.s8 %v301
    %v303 = vperm.slane %v196, %v302
    %v305 = vunpack.c.l.s4 1966171168
    %v306 = vunpack.c.0.s8 %v305
    %v307 = vperm.slane %v197, %v306
    %v309 = vunpack.c.l.s4 1966171168
    %v310 = vunpack.c.0.s8 %v309
    %v311 = vperm.slane %v198, %v310
    %v313 = vunpack.c.l.s4 1966171168
    %v314 = vunpack.c.0.s8 %v313
    %v315 = vperm.slane %v199, %v314
    %v317 = vunpack.c.l.s4 1966171168
    %v318 = vunpack.c.0.s8 %v317
    %v319 = vperm.slane %v200, %v318
    %v321 = vunpack.c.l.s4 1966171168
    %v322 = vunpack.c.0.s8 %v321
    %v323 = vperm.slane %v201, %v322
    %v325 = vunpack.c.l.s4 1966171168
    %v326 = vunpack.c.0.s8 %v325
    %v327 = vperm.slane %v202, %v326
    %v329 = vunpack.c.l.s4 1966171168
    %v330 = vunpack.c.0.s8 %v329
    %v331 = vperm.slane %v203, %v330
    %v364 = vrot.slane %v207, 4
    %v365 = vrot.slane %v211, 4
    %v366 = vrot.slane %v215, 4
    %v367 = vrot.slane %v219, 4
    %v368 = vrot.slane %v223, 4
    %v369 = vrot.slane %v227, 4
    %v370 = vrot.slane %v231, 4
    %v371 = vrot.slane %v235, 4
    %v372 = vrot.slane %v239, 4
    %v373 = vrot.slane %v243, 4
    %v374 = vrot.slane %v247, 4
    %v375 = vrot.slane %v251, 4
    %v376 = vrot.slane %v255, 4
    %v377 = vrot.slane %v259, 4
    %v378 = vrot.slane %v263, 4
    %v379 = vrot.slane %v267, 4
    %v380 = vrot.slane %v271, 4
    %v381 = vrot.slane %v275, 4
    %v382 = vrot.slane %v279, 4
    %v383 = vrot.slane %v283, 4
    %v384 = vrot.slane %v287, 4
    %v385 = vrot.slane %v291, 4
    %v386 = vrot.slane %v295, 4
    %v387 = vrot.slane %v299, 4
    %v388 = vrot.slane %v303, 4
    %v389 = vrot.slane %v307, 4
    %v390 = vrot.slane %v311, 4
    %v391 = vrot.slane %v315, 4
    %v392 = vrot.slane %v319, 4
    %v393 = vrot.slane %v323, 4
    %v394 = vrot.slane %v327, 4
    %v395 = vrot.slane %v331, 4
    %v428 = vmax.f32 %v207, %v364
    %v429 = vmax.f32 %v211, %v365
    %v430 = vmax.f32 %v215, %v366
    %v431 = vmax.f32 %v219, %v367
    %v432 = vmax.f32 %v223, %v368
    %v433 = vmax.f32 %v227, %v369
    %v434 = vmax.f32 %v231, %v370
    %v435 = vmax.f32 %v235, %v371
    %v436 = vmax.f32 %v239, %v372
    %v437 = vmax.f32 %v243, %v373
    %v438 = vmax.f32 %v247, %v374
    %v439 = vmax.f32 %v251, %v375
    %v440 = vmax.f32 %v255, %v376
    %v441 = vmax.f32 %v259, %v377
    %v442 = vmax.f32 %v263, %v378
    %v443 = vmax.f32 %v267, %v379
    %v444 = vmax.f32 %v271, %v380
    %v445 = vmax.f32 %v275, %v381
    %v446 = vmax.f32 %v279, %v382
    %v447 = vmax.f32 %v283, %v383
    %v448 = vmax.f32 %v287, %v384
    %v449 = vmax.f32 %v291, %v385
    %v450 = vmax.f32 %v295, %v386
    %v451 = vmax.f32 %v299, %v387
    %v452 = vmax.f32 %v303, %v388
    %v453 = vmax.f32 %v307, %v389
    %v454 = vmax.f32 %v311, %v390
    %v455 = vmax.f32 %v315, %v391
    %v456 = vmax.f32 %v319, %v392
    %v457 = vmax.f32 %v323, %v393
    %v458 = vmax.f32 %v327, %v394
    %v459 = vmax.f32 %v331, %v395
    %492 = vst [vmem:[#allocation1] ss:$2 sm:$0xff] %v428
    %s493 = scalar_lea.vmem [#allocation1], 1
    %494 = vst [vmem:[%s493] ss:$2 sm:$0xff] %v429
    %v495 = vld.sshfl [vmem:[#allocation1] sm:$0xff pattern:$0x75316420]
    %s496 = scalar_lea.vmem [#allocation1], 16
    %497 = vst [vmem:[%s496] ss:$2 sm:$0xff] %v430
    %s498 = scalar_lea.vmem [#allocation1], 17
    %499 = vst [vmem:[%s498] ss:$2 sm:$0xff] %v431
    %v500 = vld.sshfl [vmem:[#allocation1 + $0x10] sm:$0xff pattern:$0x75316420]
    %s501 = scalar_lea.vmem [#allocation1], 32
    %502 = vst [vmem:[%s501] ss:$2 sm:$0xff] %v432
    %s503 = scalar_lea.vmem [#allocation1], 33
    %504 = vst [vmem:[%s503] ss:$2 sm:$0xff] %v433
    %v505 = vld.sshfl [vmem:[#allocation1 + $0x20] sm:$0xff pattern:$0x75316420]
    %s506 = scalar_lea.vmem [#allocation1], 48
    %507 = vst [vmem:[%s506] ss:$2 sm:$0xff] %v434
    %s508 = scalar_lea.vmem [#allocation1], 49
    %509 = vst [vmem:[%s508] ss:$2 sm:$0xff] %v435
    %v510 = vld.sshfl [vmem:[#allocation1 + $0x30] sm:$0xff pattern:$0x75316420]
    %511 = vst [vmem:[#allocation1] ss:$2 sm:$0xff] %v436
    %512 = vst [vmem:[%s493] ss:$2 sm:$0xff] %v437
    %v513 = vld.sshfl [vmem:[#allocation1] sm:$0xff pattern:$0x75316420]
    %514 = vst [vmem:[%s496] ss:$2 sm:$0xff] %v438
    %515 = vst [vmem:[%s498] ss:$2 sm:$0xff] %v439
    %v516 = vld.sshfl [vmem:[#allocation1 + $0x10] sm:$0xff pattern:$0x75316420]
    %517 = vst [vmem:[%s501] ss:$2 sm:$0xff] %v440
    %518 = vst [vmem:[%s503] ss:$2 sm:$0xff] %v441
    %v519 = vld.sshfl [vmem:[#allocation1 + $0x20] sm:$0xff pattern:$0x75316420]
    %520 = vst [vmem:[%s506] ss:$2 sm:$0xff] %v442
    %521 = vst [vmem:[%s508] ss:$2 sm:$0xff] %v443
    %v522 = vld.sshfl [vmem:[#allocation1 + $0x30] sm:$0xff pattern:$0x75316420]
    %523 = vst [vmem:[#allocation1] ss:$2 sm:$0xff] %v444
    %524 = vst [vmem:[%s493] ss:$2 sm:$0xff] %v445
    %v525 = vld.sshfl [vmem:[#allocation1] sm:$0xff pattern:$0x75316420]
    %526 = vst [vmem:[%s496] ss:$2 sm:$0xff] %v446
    %527 = vst [vmem:[%s498] ss:$2 sm:$0xff] %v447
    %v528 = vld.sshfl [vmem:[#allocation1 + $0x10] sm:$0xff pattern:$0x75316420]
    %529 = vst [vmem:[%s501] ss:$2 sm:$0xff] %v448
    %530 = vst [vmem:[%s503] ss:$2 sm:$0xff] %v449
    %v531 = vld.sshfl [vmem:[#allocation1 + $0x20] sm:$0xff pattern:$0x75316420]
    %532 = vst [vmem:[%s506] ss:$2 sm:$0xff] %v450
    %533 = vst [vmem:[%s508] ss:$2 sm:$0xff] %v451
    %v534 = vld.sshfl [vmem:[#allocation1 + $0x30] sm:$0xff pattern:$0x75316420]
    %535 = vst [vmem:[#allocation1] ss:$2 sm:$0xff] %v452
    %536 = vst [vmem:[%s493] ss:$2 sm:$0xff] %v453
    %v537 = vld.sshfl [vmem:[#allocation1] sm:$0xff pattern:$0x75316420]
    %538 = vst [vmem:[%s496] ss:$2 sm:$0xff] %v454
    %539 = vst [vmem:[%s498] ss:$2 sm:$0xff] %v455
    %v540 = vld.sshfl [vmem:[#allocation1 + $0x10] sm:$0xff pattern:$0x75316420]
    %541 = vst [vmem:[%s501] ss:$2 sm:$0xff] %v456
    %542 = vst [vmem:[%s503] ss:$2 sm:$0xff] %v457
    %v543 = vld.sshfl [vmem:[#allocation1 + $0x20] sm:$0xff pattern:$0x75316420]
    %544 = vst [vmem:[%s506] ss:$2 sm:$0xff] %v458
    %545 = vst [vmem:[%s508] ss:$2 sm:$0xff] %v459
    %v546 = vld.sshfl [vmem:[#allocation1 + $0x30] sm:$0xff pattern:$0x75316420]
    %s563 = scalar_lea.vmem [#allocation2], 16
    %564 = vst [vmem:[%s563 + $0x1] sm:$0xff] %v495
    %565 = vst [vmem:[%s563 + $0x11] sm:$0xff] %v500
    %566 = vst [vmem:[%s563 + $0x21] sm:$0xff] %v505
    %567 = vst [vmem:[%s563 + $0x31] sm:$0xff] %v510
    %568 = vst [vmem:[%s563 + $0x41] sm:$0xff] %v513
    %569 = vst [vmem:[%s563 + $0x51] sm:$0xff] %v516
    %570 = vst [vmem:[%s563 + $0x61] sm:$0xff] %v519
    %571 = vst [vmem:[%s563 + $0x71] sm:$0xff] %v522
    %572 = vst [vmem:[%s563 + $0xa1] sm:$0xff] %v525
    %573 = vst [vmem:[%s563 + $0xb1] sm:$0xff] %v528
    %574 = vst [vmem:[%s563 + $0xc1] sm:$0xff] %v531
    %575 = vst [vmem:[%s563 + $0xd1] sm:$0xff] %v534
    %576 = vst [vmem:[%s563 + $0xe1] sm:$0xff] %v537
    %577 = vst [vmem:[%s563 + $0xf1] sm:$0xff] %v540
    %578 = vst [vmem:[%s563 + $0x101] sm:$0xff] %v543
    %579 = vst [vmem:[%s563 + $0x111] sm:$0xff] %v546
    %v580 = vld [vmem:[#allocation2] sm:$0xff]
    %v581 = vld [vmem:[#allocation2 + $0x10] sm:$0xff]
    %v582 = vld [vmem:[#allocation2 + $0x20] sm:$0xff]
    %v583 = vld [vmem:[#allocation2 + $0x30] sm:$0xff]
    %v584 = vld [vmem:[#allocation2 + $0x40] sm:$0xff]
    %v585 = vld [vmem:[#allocation2 + $0x50] sm:$0xff]
    %v586 = vld [vmem:[#allocation2 + $0x60] sm:$0xff]
    %v587 = vld [vmem:[#allocation2 + $0x70] sm:$0xff]
    %v588 = vld [vmem:[#allocation2 + $0xa0] sm:$0xff]
    %v589 = vld [vmem:[#allocation2 + $0xb0] sm:$0xff]
    %v590 = vld [vmem:[#allocation2 + $0xc0] sm:$0xff]
    %v591 = vld [vmem:[#allocation2 + $0xd0] sm:$0xff]
    %v592 = vld [vmem:[#allocation2 + $0xe0] sm:$0xff]
    %v593 = vld [vmem:[#allocation2 + $0xf0] sm:$0xff]
    %v594 = vld [vmem:[#allocation2 + $0x100] sm:$0xff]
    %v595 = vld [vmem:[#allocation2 + $0x110] sm:$0xff]
    %v596 = vld [vmem:[#allocation2 + $0x1] sm:$0xff]
    %v597 = vld [vmem:[#allocation2 + $0x11] sm:$0xff]
    %v598 = vld [vmem:[#allocation2 + $0x21] sm:$0xff]
    %v599 = vld [vmem:[#allocation2 + $0x31] sm:$0xff]
    %v600 = vld [vmem:[#allocation2 + $0x41] sm:$0xff]
    %v601 = vld [vmem:[#allocation2 + $0x51] sm:$0xff]
    %v602 = vld [vmem:[#allocation2 + $0x61] sm:$0xff]
    %v603 = vld [vmem:[#allocation2 + $0x71] sm:$0xff]
    %v604 = vld [vmem:[#allocation2 + $0xa1] sm:$0xff]
    %v605 = vld [vmem:[#allocation2 + $0xb1] sm:$0xff]
    %v606 = vld [vmem:[#allocation2 + $0xc1] sm:$0xff]
    %v607 = vld [vmem:[#allocation2 + $0xd1] sm:$0xff]
    %v608 = vld [vmem:[#allocation2 + $0xe1] sm:$0xff]
    %v609 = vld [vmem:[#allocation2 + $0xf1] sm:$0xff]
    %v610 = vld [vmem:[#allocation2 + $0x101] sm:$0xff]
    %v611 = vld [vmem:[#allocation2 + $0x111] sm:$0xff]
    %v612 = vld [vmem:[#allocation2 + $0x2] sm:$0xff]
    %v613 = vld [vmem:[#allocation2 + $0x12] sm:$0xff]
    %v614 = vld [vmem:[#allocation2 + $0x22] sm:$0xff]
    %v615 = vld [vmem:[#allocation2 + $0x32] sm:$0xff]
    %v616 = vld [vmem:[#allocation2 + $0x42] sm:$0xff]
    %v617 = vld [vmem:[#allocation2 + $0x52] sm:$0xff]
    %v618 = vld [vmem:[#allocation2 + $0x62] sm:$0xff]
    %v619 = vld [vmem:[#allocation2 + $0x72] sm:$0xff]
    %v620 = vld [vmem:[#allocation2 + $0xa2] sm:$0xff]
    %v621 = vld [vmem:[#allocation2 + $0xb2] sm:$0xff]
    %v622 = vld [vmem:[#allocation2 + $0xc2] sm:$0xff]
    %v623 = vld [vmem:[#allocation2 + $0xd2] sm:$0xff]
    %v624 = vld [vmem:[#allocation2 + $0xe2] sm:$0xff]
    %v625 = vld [vmem:[#allocation2 + $0xf2] sm:$0xff]
    %v626 = vld [vmem:[#allocation2 + $0x102] sm:$0xff]
    %v627 = vld [vmem:[#allocation2 + $0x112] sm:$0xff]
    %v628 = vld [vmem:[%s563] sm:$0xff]
    %v629 = vld [vmem:[%s563 + $0x10] sm:$0xff]
    %v630 = vld [vmem:[%s563 + $0x20] sm:$0xff]
    %v631 = vld [vmem:[%s563 + $0x30] sm:$0xff]
    %v632 = vld [vmem:[%s563 + $0x40] sm:$0xff]
    %v633 = vld [vmem:[%s563 + $0x50] sm:$0xff]
    %v634 = vld [vmem:[%s563 + $0x60] sm:$0xff]
    %v635 = vld [vmem:[%s563 + $0x70] sm:$0xff]
    %v636 = vld [vmem:[%s563 + $0xa0] sm:$0xff]
    %v637 = vld [vmem:[%s563 + $0xb0] sm:$0xff]
    %v638 = vld [vmem:[%s563 + $0xc0] sm:$0xff]
    %v639 = vld [vmem:[%s563 + $0xd0] sm:$0xff]
    %v640 = vld [vmem:[%s563 + $0xe0] sm:$0xff]
    %v641 = vld [vmem:[%s563 + $0xf0] sm:$0xff]
    %v642 = vld [vmem:[%s563 + $0x100] sm:$0xff]
    %v643 = vld [vmem:[%s563 + $0x110] sm:$0xff]
    %v644 = vld [vmem:[%s563 + $0x1] sm:$0xff]
    %v645 = vld [vmem:[%s563 + $0x11] sm:$0xff]
    %v646 = vld [vmem:[%s563 + $0x21] sm:$0xff]
    %v647 = vld [vmem:[%s563 + $0x31] sm:$0xff]
    %v648 = vld [vmem:[%s563 + $0x41] sm:$0xff]
    %v649 = vld [vmem:[%s563 + $0x51] sm:$0xff]
    %v650 = vld [vmem:[%s563 + $0x61] sm:$0xff]
    %v651 = vld [vmem:[%s563 + $0x71] sm:$0xff]
    %v652 = vld [vmem:[%s563 + $0xa1] sm:$0xff]
    %v653 = vld [vmem:[%s563 + $0xb1] sm:$0xff]
    %v654 = vld [vmem:[%s563 + $0xc1] sm:$0xff]
    %v655 = vld [vmem:[%s563 + $0xd1] sm:$0xff]
    %v656 = vld [vmem:[%s563 + $0xe1] sm:$0xff]
    %v657 = vld [vmem:[%s563 + $0xf1] sm:$0xff]
    %v658 = vld [vmem:[%s563 + $0x101] sm:$0xff]
    %v659 = vld [vmem:[%s563 + $0x111] sm:$0xff]
    %v660 = vld [vmem:[%s563 + $0x2] sm:$0xff]
    %v661 = vld [vmem:[%s563 + $0x12] sm:$0xff]
    %v662 = vld [vmem:[%s563 + $0x22] sm:$0xff]
    %v663 = vld [vmem:[%s563 + $0x32] sm:$0xff]
    %v664 = vld [vmem:[%s563 + $0x42] sm:$0xff]
    %v665 = vld [vmem:[%s563 + $0x52] sm:$0xff]
    %v666 = vld [vmem:[%s563 + $0x62] sm:$0xff]
    %v667 = vld [vmem:[%s563 + $0x72] sm:$0xff]
    %v668 = vld [vmem:[%s563 + $0xa2] sm:$0xff]
    %v669 = vld [vmem:[%s563 + $0xb2] sm:$0xff]
    %v670 = vld [vmem:[%s563 + $0xc2] sm:$0xff]
    %v671 = vld [vmem:[%s563 + $0xd2] sm:$0xff]
    %v672 = vld [vmem:[%s563 + $0xe2] sm:$0xff]
    %v673 = vld [vmem:[%s563 + $0xf2] sm:$0xff]
    %v674 = vld [vmem:[%s563 + $0x102] sm:$0xff]
    %v675 = vld [vmem:[%s563 + $0x112] sm:$0xff]
    %s676 = scalar_lea.vmem [#allocation2], 32
    %v677 = vld [vmem:[%s676] sm:$0xff]
    %v678 = vld [vmem:[%s676 + $0x10] sm:$0xff]
    %v679 = vld [vmem:[%s676 + $0x20] sm:$0xff]
    %v680 = vld [vmem:[%s676 + $0x30] sm:$0xff]
    %v681 = vld [vmem:[%s676 + $0x40] sm:$0xff]
    %v682 = vld [vmem:[%s676 + $0x50] sm:$0xff]
    %v683 = vld [vmem:[%s676 + $0x60] sm:$0xff]
    %v684 = vld [vmem:[%s676 + $0x70] sm:$0xff]
    %v685 = vld [vmem:[%s676 + $0xa0] sm:$0xff]
    %v686 = vld [vmem:[%s676 + $0xb0] sm:$0xff]
    %v687 = vld [vmem:[%s676 + $0xc0] sm:$0xff]
    %v688 = vld [vmem:[%s676 + $0xd0] sm:$0xff]
    %v689 = vld [vmem:[%s676 + $0xe0] sm:$0xff]
    %v690 = vld [vmem:[%s676 + $0xf0] sm:$0xff]
    %v691 = vld [vmem:[%s676 + $0x100] sm:$0xff]
    %v692 = vld [vmem:[%s676 + $0x110] sm:$0xff]
    %v693 = vld [vmem:[%s676 + $0x1] sm:$0xff]
    %v694 = vld [vmem:[%s676 + $0x11] sm:$0xff]
    %v695 = vld [vmem:[%s676 + $0x21] sm:$0xff]
    %v696 = vld [vmem:[%s676 + $0x31] sm:$0xff]
    %v697 = vld [vmem:[%s676 + $0x41] sm:$0xff]
    %v698 = vld [vmem:[%s676 + $0x51] sm:$0xff]
    %v699 = vld [vmem:[%s676 + $0x61] sm:$0xff]
    %v700 = vld [vmem:[%s676 + $0x71] sm:$0xff]
    %v701 = vld [vmem:[%s676 + $0xa1] sm:$0xff]
    %v702 = vld [vmem:[%s676 + $0xb1] sm:$0xff]
    %v703 = vld [vmem:[%s676 + $0xc1] sm:$0xff]
    %v704 = vld [vmem:[%s676 + $0xd1] sm:$0xff]
    %v705 = vld [vmem:[%s676 + $0xe1] sm:$0xff]
    %v706 = vld [vmem:[%s676 + $0xf1] sm:$0xff]
    %v707 = vld [vmem:[%s676 + $0x101] sm:$0xff]
    %v708 = vld [vmem:[%s676 + $0x111] sm:$0xff]
    %v709 = vld [vmem:[%s676 + $0x2] sm:$0xff]
    %v710 = vld [vmem:[%s676 + $0x12] sm:$0xff]
    %v711 = vld [vmem:[%s676 + $0x22] sm:$0xff]
    %v712 = vld [vmem:[%s676 + $0x32] sm:$0xff]
    %v713 = vld [vmem:[%s676 + $0x42] sm:$0xff]
    %v714 = vld [vmem:[%s676 + $0x52] sm:$0xff]
    %v715 = vld [vmem:[%s676 + $0x62] sm:$0xff]
    %v716 = vld [vmem:[%s676 + $0x72] sm:$0xff]
    %v717 = vld [vmem:[%s676 + $0xa2] sm:$0xff]
    %v718 = vld [vmem:[%s676 + $0xb2] sm:$0xff]
    %v719 = vld [vmem:[%s676 + $0xc2] sm:$0xff]
    %v720 = vld [vmem:[%s676 + $0xd2] sm:$0xff]
    %v721 = vld [vmem:[%s676 + $0xe2] sm:$0xff]
    %v722 = vld [vmem:[%s676 + $0xf2] sm:$0xff]
    %v723 = vld [vmem:[%s676 + $0x102] sm:$0xff]
    %v724 = vld [vmem:[%s676 + $0x112] sm:$0xff]
    %v725 = vld [vmem:[#allocation6] sm:$0xff]
    %v726 = vld [vmem:[#allocation6 + $0x8] sm:$0xff]
    %v727 = vld [vmem:[#allocation6 + $0x10] sm:$0xff]
    %v728 = vld [vmem:[#allocation6 + $0x18] sm:$0xff]
    %v729 = vld [vmem:[#allocation6 + $0x20] sm:$0xff]
    %v730 = vld [vmem:[#allocation6 + $0x28] sm:$0xff]
    %v731 = vld [vmem:[#allocation6 + $0x30] sm:$0xff]
    %v732 = vld [vmem:[#allocation6 + $0x38] sm:$0xff]
    %v733 = vld [vmem:[#allocation6 + $0x40] sm:$0xff]
    %v734 = vld [vmem:[#allocation6 + $0x48] sm:$0xff]
    %v735 = vld [vmem:[#allocation6 + $0x50] sm:$0xff]
    %v736 = vld [vmem:[#allocation6 + $0x58] sm:$0xff]
    %v737 = vld [vmem:[#allocation6 + $0x60] sm:$0xff]
    %v738 = vld [vmem:[#allocation6 + $0x68] sm:$0xff]
    %v739 = vld [vmem:[#allocation6 + $0x70] sm:$0xff]
    %v740 = vld [vmem:[#allocation6 + $0x78] sm:$0xff]
    %v741 = vld [vmem:[#allocation6 + $0x80] sm:$0xff]
    %v742 = vld [vmem:[#allocation6 + $0x88] sm:$0xff]
    %v743 = vld [vmem:[#allocation6 + $0x90] sm:$0xff]
    %v744 = vld [vmem:[#allocation6 + $0x98] sm:$0xff]
    %v745 = vld [vmem:[#allocation6 + $0xa0] sm:$0xff]
    %v746 = vld [vmem:[#allocation6 + $0xa8] sm:$0xff]
    %v747 = vld [vmem:[#allocation6 + $0xb0] sm:$0xff]
    %v748 = vld [vmem:[#allocation6 + $0xb8] sm:$0xff]
    %v749 = vld [vmem:[#allocation6 + $0xc0] sm:$0xff]
    %v750 = vld [vmem:[#allocation6 + $0xc8] sm:$0xff]
    %v751 = vld [vmem:[#allocation6 + $0xd0] sm:$0xff]
    %v752 = vld [vmem:[#allocation6 + $0xd8] sm:$0xff]
    %v753 = vld [vmem:[#allocation6 + $0xe0] sm:$0xff]
    %v754 = vld [vmem:[#allocation6 + $0xe8] sm:$0xff]
    %v755 = vld [vmem:[#allocation6 + $0xf0] sm:$0xff]
    %v756 = vld [vmem:[#allocation6 + $0xf8] sm:$0xff]
    %v757 = vld [vmem:[#allocation6 + $0x100] sm:$0xff]
    %v758 = vld [vmem:[#allocation6 + $0x108] sm:$0xff]
    %v759 = vld [vmem:[#allocation6 + $0x110] sm:$0xff]
    %v760 = vld [vmem:[#allocation6 + $0x118] sm:$0xff]
    %v761 = vld [vmem:[#allocation6 + $0x120] sm:$0xff]
    %v762 = vld [vmem:[#allocation6 + $0x128] sm:$0xff]
    %v763 = vld [vmem:[#allocation6 + $0x130] sm:$0xff]
    %v764 = vld [vmem:[#allocation6 + $0x138] sm:$0xff]
    %v765 = vld [vmem:[#allocation6 + $0x140] sm:$0xff]
    %v766 = vld [vmem:[#allocation6 + $0x148] sm:$0xff]
    %v767 = vld [vmem:[#allocation6 + $0x150] sm:$0xff]
    %v768 = vld [vmem:[#allocation6 + $0x158] sm:$0xff]
    %v769 = vld [vmem:[#allocation6 + $0x160] sm:$0xff]
    %v770 = vld [vmem:[#allocation6 + $0x168] sm:$0xff]
    %v771 = vld [vmem:[#allocation6 + $0x170] sm:$0xff]
    %v772 = vld [vmem:[#allocation6 + $0x178] sm:$0xff]
    %v773 = vld [vmem:[#allocation6 + $0x180] sm:$0xff]
    %v774 = vld [vmem:[#allocation6 + $0x188] sm:$0xff]
    %v775 = vld [vmem:[#allocation6 + $0x190] sm:$0xff]
    %v776 = vld [vmem:[#allocation6 + $0x198] sm:$0xff]
    %v777 = vld [vmem:[#allocation6 + $0x1a0] sm:$0xff]
    %v778 = vld [vmem:[#allocation6 + $0x1a8] sm:$0xff]
    %v779 = vld [vmem:[#allocation6 + $0x1b0] sm:$0xff]
    %v780 = vld [vmem:[#allocation6 + $0x1b8] sm:$0xff]
    %v781 = vld [vmem:[#allocation6 + $0x1c0] sm:$0xff]
    %v782 = vld [vmem:[#allocation6 + $0x1c8] sm:$0xff]
    %v783 = vld [vmem:[#allocation6 + $0x1d0] sm:$0xff]
    %v784 = vld [vmem:[#allocation6 + $0x1d8] sm:$0xff]
    %v785 = vld [vmem:[#allocation6 + $0x1e0] sm:$0xff]
    %v786 = vld [vmem:[#allocation6 + $0x1e8] sm:$0xff]
    %v787 = vld [vmem:[#allocation6 + $0x1f0] sm:$0xff]
    %v788 = vld [vmem:[#allocation6 + $0x1f8] sm:$0xff]
    %v789 = vld [vmem:[#allocation6 + $0x200] sm:$0xff]
    %v790 = vld [vmem:[#allocation6 + $0x208] sm:$0xff]
    %v791 = vld [vmem:[#allocation6 + $0x210] sm:$0xff]
    %v792 = vld [vmem:[#allocation6 + $0x218] sm:$0xff]
    %v793 = vld [vmem:[#allocation6 + $0x220] sm:$0xff]
    %v794 = vld [vmem:[#allocation6 + $0x228] sm:$0xff]
    %v795 = vld [vmem:[#allocation6 + $0x230] sm:$0xff]
    %v796 = vld [vmem:[#allocation6 + $0x238] sm:$0xff]
    %v797 = vld [vmem:[#allocation6 + $0x240] sm:$0xff]
    %v798 = vld [vmem:[#allocation6 + $0x248] sm:$0xff]
    %v799 = vld [vmem:[#allocation6 + $0x250] sm:$0xff]
    %v800 = vld [vmem:[#allocation6 + $0x258] sm:$0xff]
    %v801 = vld [vmem:[#allocation6 + $0x260] sm:$0xff]
    %v802 = vld [vmem:[#allocation6 + $0x268] sm:$0xff]
    %v803 = vld [vmem:[#allocation6 + $0x270] sm:$0xff]
    %v804 = vld [vmem:[#allocation6 + $0x278] sm:$0xff]
    %v805 = vld [vmem:[#allocation6 + $0x280] sm:$0xff]
    %v806 = vld [vmem:[#allocation6 + $0x288] sm:$0xff]
    %v807 = vld [vmem:[#allocation6 + $0x290] sm:$0xff]
    %v808 = vld [vmem:[#allocation6 + $0x298] sm:$0xff]
    %v809 = vld [vmem:[#allocation6 + $0x2a0] sm:$0xff]
    %v810 = vld [vmem:[#allocation6 + $0x2a8] sm:$0xff]
    %v811 = vld [vmem:[#allocation6 + $0x2b0] sm:$0xff]
    %v812 = vld [vmem:[#allocation6 + $0x2b8] sm:$0xff]
    %v813 = vld [vmem:[#allocation6 + $0x2c0] sm:$0xff]
    %v814 = vld [vmem:[#allocation6 + $0x2c8] sm:$0xff]
    %v815 = vld [vmem:[#allocation6 + $0x2d0] sm:$0xff]
    %v816 = vld [vmem:[#allocation6 + $0x2d8] sm:$0xff]
    %v817 = vld [vmem:[#allocation6 + $0x2e0] sm:$0xff]
    %v818 = vld [vmem:[#allocation6 + $0x2e8] sm:$0xff]
    %v819 = vld [vmem:[#allocation6 + $0x2f0] sm:$0xff]
    %v820 = vld [vmem:[#allocation6 + $0x2f8] sm:$0xff]
    %v821 = vld [vmem:[#allocation6 + $0x300] sm:$0xff]
    %v822 = vld [vmem:[#allocation6 + $0x308] sm:$0xff]
    %v823 = vld [vmem:[#allocation6 + $0x310] sm:$0xff]
    %v824 = vld [vmem:[#allocation6 + $0x318] sm:$0xff]
    %v825 = vld [vmem:[#allocation6 + $0x320] sm:$0xff]
    %v826 = vld [vmem:[#allocation6 + $0x328] sm:$0xff]
    %v827 = vld [vmem:[#allocation6 + $0x330] sm:$0xff]
    %v828 = vld [vmem:[#allocation6 + $0x338] sm:$0xff]
    %v829 = vld [vmem:[#allocation6 + $0x340] sm:$0xff]
    %v830 = vld [vmem:[#allocation6 + $0x348] sm:$0xff]
    %v831 = vld [vmem:[#allocation6 + $0x350] sm:$0xff]
    %v832 = vld [vmem:[#allocation6 + $0x358] sm:$0xff]
    %v833 = vld [vmem:[#allocation6 + $0x360] sm:$0xff]
    %v834 = vld [vmem:[#allocation6 + $0x368] sm:$0xff]
    %v835 = vld [vmem:[#allocation6 + $0x370] sm:$0xff]
    %v836 = vld [vmem:[#allocation6 + $0x378] sm:$0xff]
    %v837 = vld [vmem:[#allocation6 + $0x380] sm:$0xff]
    %v838 = vld [vmem:[#allocation6 + $0x388] sm:$0xff]
    %v839 = vld [vmem:[#allocation6 + $0x390] sm:$0xff]
    %v840 = vld [vmem:[#allocation6 + $0x398] sm:$0xff]
    %v841 = vld [vmem:[#allocation6 + $0x3a0] sm:$0xff]
    %v842 = vld [vmem:[#allocation6 + $0x3a8] sm:$0xff]
    %v843 = vld [vmem:[#allocation6 + $0x3b0] sm:$0xff]
    %v844 = vld [vmem:[#allocation6 + $0x3b8] sm:$0xff]
    %v845 = vld [vmem:[#allocation6 + $0x3c0] sm:$0xff]
    %v846 = vld [vmem:[#allocation6 + $0x3c8] sm:$0xff]
    %v847 = vld [vmem:[#allocation6 + $0x3d0] sm:$0xff]
    %v848 = vld [vmem:[#allocation6 + $0x3d8] sm:$0xff]
    %v849 = vld [vmem:[#allocation6 + $0x3e0] sm:$0xff]
    %v850 = vld [vmem:[#allocation6 + $0x3e8] sm:$0xff]
    %v851 = vld [vmem:[#allocation6 + $0x3f0] sm:$0xff]
    %v852 = vld [vmem:[#allocation6 + $0x3f8] sm:$0xff]
    %v853 = vld [vmem:[#allocation6 + $0x400] sm:$0xff]
    %v854 = vld [vmem:[#allocation6 + $0x408] sm:$0xff]
    %v855 = vld [vmem:[#allocation6 + $0x410] sm:$0xff]
    %v856 = vld [vmem:[#allocation6 + $0x418] sm:$0xff]
    %v857 = vld [vmem:[#allocation6 + $0x420] sm:$0xff]
    %v858 = vld [vmem:[#allocation6 + $0x428] sm:$0xff]
    %v859 = vld [vmem:[#allocation6 + $0x430] sm:$0xff]
    %v860 = vld [vmem:[#allocation6 + $0x438] sm:$0xff]
    %v861 = vld [vmem:[#allocation6 + $0x440] sm:$0xff]
    %v862 = vld [vmem:[#allocation6 + $0x448] sm:$0xff]
    %v863 = vld [vmem:[#allocation6 + $0x450] sm:$0xff]
    %v864 = vld [vmem:[#allocation6 + $0x458] sm:$0xff]
    %v865 = vld [vmem:[#allocation6 + $0x460] sm:$0xff]
    %v866 = vld [vmem:[#allocation6 + $0x468] sm:$0xff]
    %v867 = vld [vmem:[#allocation6 + $0x470] sm:$0xff]
    %v868 = vld [vmem:[#allocation6 + $0x478] sm:$0xff]
    %v869 = vld [vmem:[%s2] sm:$0x1]
    %v871 = vperm.slane %v869, 0
    %873 = vmatpush.msra.mxu0 %v740
    %874 = vmatpush.msra.mxu0 %v739
    %875 = vmatpush.msra.mxu0 %v738
    %876 = vmatpush.msra.mxu0 %v737
    %877 = vmatpush.msra.mxu0 %v736
    %878 = vmatpush.msra.mxu0 %v735
    %879 = vmatpush.msra.mxu0 %v734
    %880 = vmatpush.msra.mxu0 %v733
    %881 = vmatpush.msra.mxu0 %v732
    %882 = vmatpush.msra.mxu0 %v731
    %883 = vmatpush.msra.mxu0 %v730
    %884 = vmatpush.msra.mxu0 %v729
    %885 = vmatpush.msra.mxu0 %v728
    %886 = vmatpush.msra.mxu0 %v727
    %887 = vmatpush.msra.mxu0 %v726
    %888 = vmatpush.msra.mxu0 %v725
    %889 = vmatmul.f32.gmra.mxu0 %v580
    %v890 = vpop.f32.mrf.mxu0
    %v891 = vadd.f32 %v871, %v890
    %892 = vmatmul.f32.gmra.mxu0 %v581
    %v893 = vpop.f32.mrf.mxu0
    %v894 = vadd.f32 %v871, %v893
    %895 = vmatmul.f32.gmra.mxu0 %v582
    %v896 = vpop.f32.mrf.mxu0
    %v897 = vadd.f32 %v871, %v896
    %898 = vmatmul.f32.gmra.mxu0 %v583
    %v899 = vpop.f32.mrf.mxu0
    %v900 = vadd.f32 %v871, %v899
    %901 = vmatmul.f32.gmra.mxu0 %v584
    %v902 = vpop.f32.mrf.mxu0
    %v903 = vadd.f32 %v871, %v902
    %904 = vmatmul.f32.gmra.mxu0 %v585
    %v905 = vpop.f32.mrf.mxu0
    %v906 = vadd.f32 %v871, %v905
    %907 = vmatmul.f32.gmra.mxu0 %v586
    %v908 = vpop.f32.mrf.mxu0
    %v909 = vadd.f32 %v871, %v908
    %910 = vmatmul.f32.gmra.mxu0 %v587
    %v911 = vpop.f32.mrf.mxu0
    %v912 = vadd.f32 %v871, %v911
    %913 = vmatmul.f32.gmra.mxu0 %v588
    %v914 = vpop.f32.mrf.mxu0
    %v915 = vadd.f32 %v871, %v914
    %916 = vmatmul.f32.gmra.mxu0 %v589
    %v917 = vpop.f32.mrf.mxu0
    %v918 = vadd.f32 %v871, %v917
    %919 = vmatmul.f32.gmra.mxu0 %v590
    %v920 = vpop.f32.mrf.mxu0
    %v921 = vadd.f32 %v871, %v920
    %922 = vmatmul.f32.gmra.mxu0 %v591
    %v923 = vpop.f32.mrf.mxu0
    %v924 = vadd.f32 %v871, %v923
    %925 = vmatmul.f32.gmra.mxu0 %v592
    %v926 = vpop.f32.mrf.mxu0
    %v927 = vadd.f32 %v871, %v926
    %928 = vmatmul.f32.gmra.mxu0 %v593
    %v929 = vpop.f32.mrf.mxu0
    %v930 = vadd.f32 %v871, %v929
    %931 = vmatmul.f32.gmra.mxu0 %v594
    %v932 = vpop.f32.mrf.mxu0
    %v933 = vadd.f32 %v871, %v932
    %934 = vmatmul.f32.gmra.mxu0 %v595
    %v935 = vpop.f32.mrf.mxu0
    %v936 = vadd.f32 %v871, %v935
    %937 = vdwg.mxu0
    %938 = vmatpush.msra.mxu0 %v756
    %939 = vmatpush.msra.mxu0 %v755
    %940 = vmatpush.msra.mxu0 %v754
    %941 = vmatpush.msra.mxu0 %v753
    %942 = vmatpush.msra.mxu0 %v752
    %943 = vmatpush.msra.mxu0 %v751
    %944 = vmatpush.msra.mxu0 %v750
    %945 = vmatpush.msra.mxu0 %v749
    %946 = vmatpush.msra.mxu0 %v748
    %947 = vmatpush.msra.mxu0 %v747
    %948 = vmatpush.msra.mxu0 %v746
    %949 = vmatpush.msra.mxu0 %v745
    %950 = vmatpush.msra.mxu0 %v744
    %951 = vmatpush.msra.mxu0 %v743
    %952 = vmatpush.msra.mxu0 %v742
    %953 = vmatpush.msra.mxu0 %v741
    %954 = vmatmul.f32.gmra.mxu0 %v596
    %v955 = vpop.f32.mrf.mxu0
    %v956 = vadd.f32 %v891, %v955
    %957 = vmatmul.f32.gmra.mxu0 %v597
    %v958 = vpop.f32.mrf.mxu0
    %v959 = vadd.f32 %v894, %v958
    %960 = vmatmul.f32.gmra.mxu0 %v598
    %v961 = vpop.f32.mrf.mxu0
    %v962 = vadd.f32 %v897, %v961
    %963 = vmatmul.f32.gmra.mxu0 %v599
    %v964 = vpop.f32.mrf.mxu0
    %v965 = vadd.f32 %v900, %v964
    %966 = vmatmul.f32.gmra.mxu0 %v600
    %v967 = vpop.f32.mrf.mxu0
    %v968 = vadd.f32 %v903, %v967
    %969 = vmatmul.f32.gmra.mxu0 %v601
    %v970 = vpop.f32.mrf.mxu0
    %v971 = vadd.f32 %v906, %v970
    %972 = vmatmul.f32.gmra.mxu0 %v602
    %v973 = vpop.f32.mrf.mxu0
    %v974 = vadd.f32 %v909, %v973
    %975 = vmatmul.f32.gmra.mxu0 %v603
    %v976 = vpop.f32.mrf.mxu0
    %v977 = vadd.f32 %v912, %v976
    %978 = vmatmul.f32.gmra.mxu0 %v604
    %v979 = vpop.f32.mrf.mxu0
    %v980 = vadd.f32 %v915, %v979
    %981 = vmatmul.f32.gmra.mxu0 %v605
    %v982 = vpop.f32.mrf.mxu0
    %v983 = vadd.f32 %v918, %v982
    %984 = vmatmul.f32.gmra.mxu0 %v606
    %v985 = vpop.f32.mrf.mxu0
    %v986 = vadd.f32 %v921, %v985
    %987 = vmatmul.f32.gmra.mxu0 %v607
    %v988 = vpop.f32.mrf.mxu0
    %v989 = vadd.f32 %v924, %v988
    %990 = vmatmul.f32.gmra.mxu0 %v608
    %v991 = vpop.f32.mrf.mxu0
    %v992 = vadd.f32 %v927, %v991
    %993 = vmatmul.f32.gmra.mxu0 %v609
    %v994 = vpop.f32.mrf.mxu0
    %v995 = vadd.f32 %v930, %v994
    %996 = vmatmul.f32.gmra.mxu0 %v610
    %v997 = vpop.f32.mrf.mxu0
    %v998 = vadd.f32 %v933, %v997
    %999 = vmatmul.f32.gmra.mxu0 %v611
    %v1000 = vpop.f32.mrf.mxu0
    %v1001 = vadd.f32 %v936, %v1000
    %1002 = vdwg.mxu0
    %1003 = vmatpush.msra.mxu0 %v772
    %1004 = vmatpush.msra.mxu0 %v771
    %1005 = vmatpush.msra.mxu0 %v770
    %1006 = vmatpush.msra.mxu0 %v769
    %1007 = vmatpush.msra.mxu0 %v768
    %1008 = vmatpush.msra.mxu0 %v767
    %1009 = vmatpush.msra.mxu0 %v766
    %1010 = vmatpush.msra.mxu0 %v765
    %1011 = vmatpush.msra.mxu0 %v764
    %1012 = vmatpush.msra.mxu0 %v763
    %1013 = vmatpush.msra.mxu0 %v762
    %1014 = vmatpush.msra.mxu0 %v761
    %1015 = vmatpush.msra.mxu0 %v760
    %1016 = vmatpush.msra.mxu0 %v759
    %1017 = vmatpush.msra.mxu0 %v758
    %1018 = vmatpush.msra.mxu0 %v757
    %1019 = vmatmul.f32.gmra.mxu0 %v612
    %v1020 = vpop.f32.mrf.mxu0
    %v1021 = vadd.f32 %v956, %v1020
    %1022 = vmatmul.f32.gmra.mxu0 %v613
    %v1023 = vpop.f32.mrf.mxu0
    %v1024 = vadd.f32 %v959, %v1023
    %1025 = vmatmul.f32.gmra.mxu0 %v614
    %v1026 = vpop.f32.mrf.mxu0
    %v1027 = vadd.f32 %v962, %v1026
    %1028 = vmatmul.f32.gmra.mxu0 %v615
    %v1029 = vpop.f32.mrf.mxu0
    %v1030 = vadd.f32 %v965, %v1029
    %1031 = vmatmul.f32.gmra.mxu0 %v616
    %v1032 = vpop.f32.mrf.mxu0
    %v1033 = vadd.f32 %v968, %v1032
    %1034 = vmatmul.f32.gmra.mxu0 %v617
    %v1035 = vpop.f32.mrf.mxu0
    %v1036 = vadd.f32 %v971, %v1035
    %1037 = vmatmul.f32.gmra.mxu0 %v618
    %v1038 = vpop.f32.mrf.mxu0
    %v1039 = vadd.f32 %v974, %v1038
    %1040 = vmatmul.f32.gmra.mxu0 %v619
    %v1041 = vpop.f32.mrf.mxu0
    %v1042 = vadd.f32 %v977, %v1041
    %1043 = vmatmul.f32.gmra.mxu0 %v620
    %v1044 = vpop.f32.mrf.mxu0
    %v1045 = vadd.f32 %v980, %v1044
    %1046 = vmatmul.f32.gmra.mxu0 %v621
    %v1047 = vpop.f32.mrf.mxu0
    %v1048 = vadd.f32 %v983, %v1047
    %1049 = vmatmul.f32.gmra.mxu0 %v622
    %v1050 = vpop.f32.mrf.mxu0
    %v1051 = vadd.f32 %v986, %v1050
    %1052 = vmatmul.f32.gmra.mxu0 %v623
    %v1053 = vpop.f32.mrf.mxu0
    %v1054 = vadd.f32 %v989, %v1053
    %1055 = vmatmul.f32.gmra.mxu0 %v624
    %v1056 = vpop.f32.mrf.mxu0
    %v1057 = vadd.f32 %v992, %v1056
    %1058 = vmatmul.f32.gmra.mxu0 %v625
    %v1059 = vpop.f32.mrf.mxu0
    %v1060 = vadd.f32 %v995, %v1059
    %1061 = vmatmul.f32.gmra.mxu0 %v626
    %v1062 = vpop.f32.mrf.mxu0
    %v1063 = vadd.f32 %v998, %v1062
    %1064 = vmatmul.f32.gmra.mxu0 %v627
    %v1065 = vpop.f32.mrf.mxu0
    %v1066 = vadd.f32 %v1001, %v1065
    %1067 = vdwg.mxu0
    %1068 = vmatpush.msra.mxu0 %v788
    %1069 = vmatpush.msra.mxu0 %v787
    %1070 = vmatpush.msra.mxu0 %v786
    %1071 = vmatpush.msra.mxu0 %v785
    %1072 = vmatpush.msra.mxu0 %v784
    %1073 = vmatpush.msra.mxu0 %v783
    %1074 = vmatpush.msra.mxu0 %v782
    %1075 = vmatpush.msra.mxu0 %v781
    %1076 = vmatpush.msra.mxu0 %v780
    %1077 = vmatpush.msra.mxu0 %v779
    %1078 = vmatpush.msra.mxu0 %v778
    %1079 = vmatpush.msra.mxu0 %v777
    %1080 = vmatpush.msra.mxu0 %v776
    %1081 = vmatpush.msra.mxu0 %v775
    %1082 = vmatpush.msra.mxu0 %v774
    %1083 = vmatpush.msra.mxu0 %v773
    %1084 = vmatmul.f32.gmra.mxu0 %v628
    %v1085 = vpop.f32.mrf.mxu0
    %v1086 = vadd.f32 %v1021, %v1085
    %1087 = vmatmul.f32.gmra.mxu0 %v629
    %v1088 = vpop.f32.mrf.mxu0
    %v1089 = vadd.f32 %v1024, %v1088
    %1090 = vmatmul.f32.gmra.mxu0 %v630
    %v1091 = vpop.f32.mrf.mxu0
    %v1092 = vadd.f32 %v1027, %v1091
    %1093 = vmatmul.f32.gmra.mxu0 %v631
    %v1094 = vpop.f32.mrf.mxu0
    %v1095 = vadd.f32 %v1030, %v1094
    %1096 = vmatmul.f32.gmra.mxu0 %v632
    %v1097 = vpop.f32.mrf.mxu0
    %v1098 = vadd.f32 %v1033, %v1097
    %1099 = vmatmul.f32.gmra.mxu0 %v633
    %v1100 = vpop.f32.mrf.mxu0
    %v1101 = vadd.f32 %v1036, %v1100
    %1102 = vmatmul.f32.gmra.mxu0 %v634
    %v1103 = vpop.f32.mrf.mxu0
    %v1104 = vadd.f32 %v1039, %v1103
    %1105 = vmatmul.f32.gmra.mxu0 %v635
    %v1106 = vpop.f32.mrf.mxu0
    %v1107 = vadd.f32 %v1042, %v1106
    %1108 = vmatmul.f32.gmra.mxu0 %v636
    %v1109 = vpop.f32.mrf.mxu0
    %v1110 = vadd.f32 %v1045, %v1109
    %1111 = vmatmul.f32.gmra.mxu0 %v637
    %v1112 = vpop.f32.mrf.mxu0
    %v1113 = vadd.f32 %v1048, %v1112
    %1114 = vmatmul.f32.gmra.mxu0 %v638
    %v1115 = vpop.f32.mrf.mxu0
    %v1116 = vadd.f32 %v1051, %v1115
    %1117 = vmatmul.f32.gmra.mxu0 %v639
    %v1118 = vpop.f32.mrf.mxu0
    %v1119 = vadd.f32 %v1054, %v1118
    %1120 = vmatmul.f32.gmra.mxu0 %v640
    %v1121 = vpop.f32.mrf.mxu0
    %v1122 = vadd.f32 %v1057, %v1121
    %1123 = vmatmul.f32.gmra.mxu0 %v641
    %v1124 = vpop.f32.mrf.mxu0
    %v1125 = vadd.f32 %v1060, %v1124
    %1126 = vmatmul.f32.gmra.mxu0 %v642
    %v1127 = vpop.f32.mrf.mxu0
    %v1128 = vadd.f32 %v1063, %v1127
    %1129 = vmatmul.f32.gmra.mxu0 %v643
    %v1130 = vpop.f32.mrf.mxu0
    %v1131 = vadd.f32 %v1066, %v1130
    %1132 = vdwg.mxu0
    %1133 = vmatpush.msra.mxu0 %v804
    %1134 = vmatpush.msra.mxu0 %v803
    %1135 = vmatpush.msra.mxu0 %v802
    %1136 = vmatpush.msra.mxu0 %v801
    %1137 = vmatpush.msra.mxu0 %v800
    %1138 = vmatpush.msra.mxu0 %v799
    %1139 = vmatpush.msra.mxu0 %v798
    %1140 = vmatpush.msra.mxu0 %v797
    %1141 = vmatpush.msra.mxu0 %v796
    %1142 = vmatpush.msra.mxu0 %v795
    %1143 = vmatpush.msra.mxu0 %v794
    %1144 = vmatpush.msra.mxu0 %v793
    %1145 = vmatpush.msra.mxu0 %v792
    %1146 = vmatpush.msra.mxu0 %v791
    %1147 = vmatpush.msra.mxu0 %v790
    %1148 = vmatpush.msra.mxu0 %v789
    %1149 = vmatmul.f32.gmra.mxu0 %v644
    %v1150 = vpop.f32.mrf.mxu0
    %v1151 = vadd.f32 %v1086, %v1150
    %1152 = vmatmul.f32.gmra.mxu0 %v645
    %v1153 = vpop.f32.mrf.mxu0
    %v1154 = vadd.f32 %v1089, %v1153
    %1155 = vmatmul.f32.gmra.mxu0 %v646
    %v1156 = vpop.f32.mrf.mxu0
    %v1157 = vadd.f32 %v1092, %v1156
    %1158 = vmatmul.f32.gmra.mxu0 %v647
    %v1159 = vpop.f32.mrf.mxu0
    %v1160 = vadd.f32 %v1095, %v1159
    %1161 = vmatmul.f32.gmra.mxu0 %v648
    %v1162 = vpop.f32.mrf.mxu0
    %v1163 = vadd.f32 %v1098, %v1162
    %1164 = vmatmul.f32.gmra.mxu0 %v649
    %v1165 = vpop.f32.mrf.mxu0
    %v1166 = vadd.f32 %v1101, %v1165
    %1167 = vmatmul.f32.gmra.mxu0 %v650
    %v1168 = vpop.f32.mrf.mxu0
    %v1169 = vadd.f32 %v1104, %v1168
    %1170 = vmatmul.f32.gmra.mxu0 %v651
    %v1171 = vpop.f32.mrf.mxu0
    %v1172 = vadd.f32 %v1107, %v1171
    %1173 = vmatmul.f32.gmra.mxu0 %v652
    %v1174 = vpop.f32.mrf.mxu0
    %v1175 = vadd.f32 %v1110, %v1174
    %1176 = vmatmul.f32.gmra.mxu0 %v653
    %v1177 = vpop.f32.mrf.mxu0
    %v1178 = vadd.f32 %v1113, %v1177
    %1179 = vmatmul.f32.gmra.mxu0 %v654
    %v1180 = vpop.f32.mrf.mxu0
    %v1181 = vadd.f32 %v1116, %v1180
    %1182 = vmatmul.f32.gmra.mxu0 %v655
    %v1183 = vpop.f32.mrf.mxu0
    %v1184 = vadd.f32 %v1119, %v1183
    %1185 = vmatmul.f32.gmra.mxu0 %v656
    %v1186 = vpop.f32.mrf.mxu0
    %v1187 = vadd.f32 %v1122, %v1186
    %1188 = vmatmul.f32.gmra.mxu0 %v657
    %v1189 = vpop.f32.mrf.mxu0
    %v1190 = vadd.f32 %v1125, %v1189
    %1191 = vmatmul.f32.gmra.mxu0 %v658
    %v1192 = vpop.f32.mrf.mxu0
    %v1193 = vadd.f32 %v1128, %v1192
    %1194 = vmatmul.f32.gmra.mxu0 %v659
    %v1195 = vpop.f32.mrf.mxu0
    %v1196 = vadd.f32 %v1131, %v1195
    %1197 = vdwg.mxu0
    %1198 = vmatpush.msra.mxu0 %v820
    %1199 = vmatpush.msra.mxu0 %v819
    %1200 = vmatpush.msra.mxu0 %v818
    %1201 = vmatpush.msra.mxu0 %v817
    %1202 = vmatpush.msra.mxu0 %v816
    %1203 = vmatpush.msra.mxu0 %v815
    %1204 = vmatpush.msra.mxu0 %v814
    %1205 = vmatpush.msra.mxu0 %v813
    %1206 = vmatpush.msra.mxu0 %v812
    %1207 = vmatpush.msra.mxu0 %v811
    %1208 = vmatpush.msra.mxu0 %v810
    %1209 = vmatpush.msra.mxu0 %v809
    %1210 = vmatpush.msra.mxu0 %v808
    %1211 = vmatpush.msra.mxu0 %v807
    %1212 = vmatpush.msra.mxu0 %v806
    %1213 = vmatpush.msra.mxu0 %v805
    %1214 = vmatmul.f32.gmra.mxu0 %v660
    %v1215 = vpop.f32.mrf.mxu0
    %v1216 = vadd.f32 %v1151, %v1215
    %1217 = vmatmul.f32.gmra.mxu0 %v661
    %v1218 = vpop.f32.mrf.mxu0
    %v1219 = vadd.f32 %v1154, %v1218
    %1220 = vmatmul.f32.gmra.mxu0 %v662
    %v1221 = vpop.f32.mrf.mxu0
    %v1222 = vadd.f32 %v1157, %v1221
    %1223 = vmatmul.f32.gmra.mxu0 %v663
    %v1224 = vpop.f32.mrf.mxu0
    %v1225 = vadd.f32 %v1160, %v1224
    %1226 = vmatmul.f32.gmra.mxu0 %v664
    %v1227 = vpop.f32.mrf.mxu0
    %v1228 = vadd.f32 %v1163, %v1227
    %1229 = vmatmul.f32.gmra.mxu0 %v665
    %v1230 = vpop.f32.mrf.mxu0
    %v1231 = vadd.f32 %v1166, %v1230
    %1232 = vmatmul.f32.gmra.mxu0 %v666
    %v1233 = vpop.f32.mrf.mxu0
    %v1234 = vadd.f32 %v1169, %v1233
    %1235 = vmatmul.f32.gmra.mxu0 %v667
    %v1236 = vpop.f32.mrf.mxu0
    %v1237 = vadd.f32 %v1172, %v1236
    %1238 = vmatmul.f32.gmra.mxu0 %v668
    %v1239 = vpop.f32.mrf.mxu0
    %v1240 = vadd.f32 %v1175, %v1239
    %1241 = vmatmul.f32.gmra.mxu0 %v669
    %v1242 = vpop.f32.mrf.mxu0
    %v1243 = vadd.f32 %v1178, %v1242
    %1244 = vmatmul.f32.gmra.mxu0 %v670
    %v1245 = vpop.f32.mrf.mxu0
    %v1246 = vadd.f32 %v1181, %v1245
    %1247 = vmatmul.f32.gmra.mxu0 %v671
    %v1248 = vpop.f32.mrf.mxu0
    %v1249 = vadd.f32 %v1184, %v1248
    %1250 = vmatmul.f32.gmra.mxu0 %v672
    %v1251 = vpop.f32.mrf.mxu0
    %v1252 = vadd.f32 %v1187, %v1251
    %1253 = vmatmul.f32.gmra.mxu0 %v673
    %v1254 = vpop.f32.mrf.mxu0
    %v1255 = vadd.f32 %v1190, %v1254
    %1256 = vmatmul.f32.gmra.mxu0 %v674
    %v1257 = vpop.f32.mrf.mxu0
    %v1258 = vadd.f32 %v1193, %v1257
    %1259 = vmatmul.f32.gmra.mxu0 %v675
    %v1260 = vpop.f32.mrf.mxu0
    %v1261 = vadd.f32 %v1196, %v1260
    %1262 = vdwg.mxu0
    %1263 = vmatpush.msra.mxu0 %v836
    %1264 = vmatpush.msra.mxu0 %v835
    %1265 = vmatpush.msra.mxu0 %v834
    %1266 = vmatpush.msra.mxu0 %v833
    %1267 = vmatpush.msra.mxu0 %v832
    %1268 = vmatpush.msra.mxu0 %v831
    %1269 = vmatpush.msra.mxu0 %v830
    %1270 = vmatpush.msra.mxu0 %v829
    %1271 = vmatpush.msra.mxu0 %v828
    %1272 = vmatpush.msra.mxu0 %v827
    %1273 = vmatpush.msra.mxu0 %v826
    %1274 = vmatpush.msra.mxu0 %v825
    %1275 = vmatpush.msra.mxu0 %v824
    %1276 = vmatpush.msra.mxu0 %v823
    %1277 = vmatpush.msra.mxu0 %v822
    %1278 = vmatpush.msra.mxu0 %v821
    %1279 = vmatmul.f32.gmra.mxu0 %v677
    %v1280 = vpop.f32.mrf.mxu0
    %v1281 = vadd.f32 %v1216, %v1280
    %1282 = vmatmul.f32.gmra.mxu0 %v678
    %v1283 = vpop.f32.mrf.mxu0
    %v1284 = vadd.f32 %v1219, %v1283
    %1285 = vmatmul.f32.gmra.mxu0 %v679
    %v1286 = vpop.f32.mrf.mxu0
    %v1287 = vadd.f32 %v1222, %v1286
    %1288 = vmatmul.f32.gmra.mxu0 %v680
    %v1289 = vpop.f32.mrf.mxu0
    %v1290 = vadd.f32 %v1225, %v1289
    %1291 = vmatmul.f32.gmra.mxu0 %v681
    %v1292 = vpop.f32.mrf.mxu0
    %v1293 = vadd.f32 %v1228, %v1292
    %1294 = vmatmul.f32.gmra.mxu0 %v682
    %v1295 = vpop.f32.mrf.mxu0
    %v1296 = vadd.f32 %v1231, %v1295
    %1297 = vmatmul.f32.gmra.mxu0 %v683
    %v1298 = vpop.f32.mrf.mxu0
    %v1299 = vadd.f32 %v1234, %v1298
    %1300 = vmatmul.f32.gmra.mxu0 %v684
    %v1301 = vpop.f32.mrf.mxu0
    %v1302 = vadd.f32 %v1237, %v1301
    %1303 = vmatmul.f32.gmra.mxu0 %v685
    %v1304 = vpop.f32.mrf.mxu0
    %v1305 = vadd.f32 %v1240, %v1304
    %1306 = vmatmul.f32.gmra.mxu0 %v686
    %v1307 = vpop.f32.mrf.mxu0
    %v1308 = vadd.f32 %v1243, %v1307
    %1309 = vmatmul.f32.gmra.mxu0 %v687
    %v1310 = vpop.f32.mrf.mxu0
    %v1311 = vadd.f32 %v1246, %v1310
    %1312 = vmatmul.f32.gmra.mxu0 %v688
    %v1313 = vpop.f32.mrf.mxu0
    %v1314 = vadd.f32 %v1249, %v1313
    %1315 = vmatmul.f32.gmra.mxu0 %v689
    %v1316 = vpop.f32.mrf.mxu0
    %v1317 = vadd.f32 %v1252, %v1316
    %1318 = vmatmul.f32.gmra.mxu0 %v690
    %v1319 = vpop.f32.mrf.mxu0
    %v1320 = vadd.f32 %v1255, %v1319
    %1321 = vmatmul.f32.gmra.mxu0 %v691
    %v1322 = vpop.f32.mrf.mxu0
    %v1323 = vadd.f32 %v1258, %v1322
    %1324 = vmatmul.f32.gmra.mxu0 %v692
    %v1325 = vpop.f32.mrf.mxu0
    %v1326 = vadd.f32 %v1261, %v1325
    %1327 = vdwg.mxu0
    %1328 = vmatpush.msra.mxu0 %v852
    %1329 = vmatpush.msra.mxu0 %v851
    %1330 = vmatpush.msra.mxu0 %v850
    %1331 = vmatpush.msra.mxu0 %v849
    %1332 = vmatpush.msra.mxu0 %v848
    %1333 = vmatpush.msra.mxu0 %v847
    %1334 = vmatpush.msra.mxu0 %v846
    %1335 = vmatpush.msra.mxu0 %v845
    %1336 = vmatpush.msra.mxu0 %v844
    %1337 = vmatpush.msra.mxu0 %v843
    %1338 = vmatpush.msra.mxu0 %v842
    %1339 = vmatpush.msra.mxu0 %v841
    %1340 = vmatpush.msra.mxu0 %v840
    %1341 = vmatpush.msra.mxu0 %v839
    %1342 = vmatpush.msra.mxu0 %v838
    %1343 = vmatpush.msra.mxu0 %v837
    %1344 = vmatmul.f32.gmra.mxu0 %v693
    %v1345 = vpop.f32.mrf.mxu0
    %v1346 = vadd.f32 %v1281, %v1345
    %1347 = vmatmul.f32.gmra.mxu0 %v694
    %v1348 = vpop.f32.mrf.mxu0
    %v1349 = vadd.f32 %v1284, %v1348
    %1350 = vmatmul.f32.gmra.mxu0 %v695
    %v1351 = vpop.f32.mrf.mxu0
    %v1352 = vadd.f32 %v1287, %v1351
    %1353 = vmatmul.f32.gmra.mxu0 %v696
    %v1354 = vpop.f32.mrf.mxu0
    %v1355 = vadd.f32 %v1290, %v1354
    %1356 = vmatmul.f32.gmra.mxu0 %v697
    %v1357 = vpop.f32.mrf.mxu0
    %v1358 = vadd.f32 %v1293, %v1357
    %1359 = vmatmul.f32.gmra.mxu0 %v698
    %v1360 = vpop.f32.mrf.mxu0
    %v1361 = vadd.f32 %v1296, %v1360
    %1362 = vmatmul.f32.gmra.mxu0 %v699
    %v1363 = vpop.f32.mrf.mxu0
    %v1364 = vadd.f32 %v1299, %v1363
    %1365 = vmatmul.f32.gmra.mxu0 %v700
    %v1366 = vpop.f32.mrf.mxu0
    %v1367 = vadd.f32 %v1302, %v1366
    %1368 = vmatmul.f32.gmra.mxu0 %v701
    %v1369 = vpop.f32.mrf.mxu0
    %v1370 = vadd.f32 %v1305, %v1369
    %1371 = vmatmul.f32.gmra.mxu0 %v702
    %v1372 = vpop.f32.mrf.mxu0
    %v1373 = vadd.f32 %v1308, %v1372
    %1374 = vmatmul.f32.gmra.mxu0 %v703
    %v1375 = vpop.f32.mrf.mxu0
    %v1376 = vadd.f32 %v1311, %v1375
    %1377 = vmatmul.f32.gmra.mxu0 %v704
    %v1378 = vpop.f32.mrf.mxu0
    %v1379 = vadd.f32 %v1314, %v1378
    %1380 = vmatmul.f32.gmra.mxu0 %v705
    %v1381 = vpop.f32.mrf.mxu0
    %v1382 = vadd.f32 %v1317, %v1381
    %1383 = vmatmul.f32.gmra.mxu0 %v706
    %v1384 = vpop.f32.mrf.mxu0
    %v1385 = vadd.f32 %v1320, %v1384
    %1386 = vmatmul.f32.gmra.mxu0 %v707
    %v1387 = vpop.f32.mrf.mxu0
    %v1388 = vadd.f32 %v1323, %v1387
    %1389 = vmatmul.f32.gmra.mxu0 %v708
    %v1390 = vpop.f32.mrf.mxu0
    %v1391 = vadd.f32 %v1326, %v1390
    %1392 = vdwg.mxu0
    %1393 = vmatpush.msra.mxu0 %v868
    %1394 = vmatpush.msra.mxu0 %v867
    %1395 = vmatpush.msra.mxu0 %v866
    %1396 = vmatpush.msra.mxu0 %v865
    %1397 = vmatpush.msra.mxu0 %v864
    %1398 = vmatpush.msra.mxu0 %v863
    %1399 = vmatpush.msra.mxu0 %v862
    %1400 = vmatpush.msra.mxu0 %v861
    %1401 = vmatpush.msra.mxu0 %v860
    %1402 = vmatpush.msra.mxu0 %v859
    %1403 = vmatpush.msra.mxu0 %v858
    %1404 = vmatpush.msra.mxu0 %v857
    %1405 = vmatpush.msra.mxu0 %v856
    %1406 = vmatpush.msra.mxu0 %v855
    %1407 = vmatpush.msra.mxu0 %v854
    %1408 = vmatpush.msra.mxu0 %v853
    %1409 = vmatmul.f32.gmra.mxu0 %v709
    %v1410 = vpop.f32.mrf.mxu0
    %v1411 = vadd.f32 %v1346, %v1410
    %1412 = vmatmul.f32.gmra.mxu0 %v710
    %v1413 = vpop.f32.mrf.mxu0
    %v1414 = vadd.f32 %v1349, %v1413
    %1415 = vmatmul.f32.gmra.mxu0 %v711
    %v1416 = vpop.f32.mrf.mxu0
    %v1417 = vadd.f32 %v1352, %v1416
    %1418 = vmatmul.f32.gmra.mxu0 %v712
    %v1419 = vpop.f32.mrf.mxu0
    %v1420 = vadd.f32 %v1355, %v1419
    %1421 = vmatmul.f32.gmra.mxu0 %v713
    %v1422 = vpop.f32.mrf.mxu0
    %v1423 = vadd.f32 %v1358, %v1422
    %1424 = vmatmul.f32.gmra.mxu0 %v714
    %v1425 = vpop.f32.mrf.mxu0
    %v1426 = vadd.f32 %v1361, %v1425
    %1427 = vmatmul.f32.gmra.mxu0 %v715
    %v1428 = vpop.f32.mrf.mxu0
    %v1429 = vadd.f32 %v1364, %v1428
    %1430 = vmatmul.f32.gmra.mxu0 %v716
    %v1431 = vpop.f32.mrf.mxu0
    %v1432 = vadd.f32 %v1367, %v1431
    %1433 = vmatmul.f32.gmra.mxu0 %v717
    %v1434 = vpop.f32.mrf.mxu0
    %v1435 = vadd.f32 %v1370, %v1434
    %1436 = vmatmul.f32.gmra.mxu0 %v718
    %v1437 = vpop.f32.mrf.mxu0
    %v1438 = vadd.f32 %v1373, %v1437
    %1439 = vmatmul.f32.gmra.mxu0 %v719
    %v1440 = vpop.f32.mrf.mxu0
    %v1441 = vadd.f32 %v1376, %v1440
    %1442 = vmatmul.f32.gmra.mxu0 %v720
    %v1443 = vpop.f32.mrf.mxu0
    %v1444 = vadd.f32 %v1379, %v1443
    %1445 = vmatmul.f32.gmra.mxu0 %v721
    %v1446 = vpop.f32.mrf.mxu0
    %v1447 = vadd.f32 %v1382, %v1446
    %1448 = vmatmul.f32.gmra.mxu0 %v722
    %v1449 = vpop.f32.mrf.mxu0
    %v1450 = vadd.f32 %v1385, %v1449
    %1451 = vmatmul.f32.gmra.mxu0 %v723
    %v1452 = vpop.f32.mrf.mxu0
    %v1453 = vadd.f32 %v1388, %v1452
    %1454 = vmatmul.f32.gmra.mxu0 %v724
    %v1455 = vpop.f32.mrf.mxu0
    %v1456 = vadd.f32 %v1391, %v1455
    %1457 = vdwg.mxu0
    %v1458 = vmax.f32 %v1411, 0.0
    %v1459 = vmax.f32 %v1414, 0.0
    %v1460 = vmax.f32 %v1417, 0.0
    %v1461 = vmax.f32 %v1420, 0.0
    %v1462 = vmax.f32 %v1423, 0.0
    %v1463 = vmax.f32 %v1426, 0.0
    %v1464 = vmax.f32 %v1429, 0.0
    %v1465 = vmax.f32 %v1432, 0.0
    %v1466 = vmax.f32 %v1435, 0.0
    %v1467 = vmax.f32 %v1438, 0.0
    %v1468 = vmax.f32 %v1441, 0.0
    %v1469 = vmax.f32 %v1444, 0.0
    %v1470 = vmax.f32 %v1447, 0.0
    %v1471 = vmax.f32 %v1450, 0.0
    %v1472 = vmax.f32 %v1453, 0.0
    %v1473 = vmax.f32 %v1456, 0.0
    %1474 = vst [vmem:[%s563 + $0x1] sm:$0xff] %v1458
    %1475 = vst [vmem:[%s563 + $0x11] sm:$0xff] %v1459
    %1476 = vst [vmem:[%s563 + $0x21] sm:$0xff] %v1460
    %1477 = vst [vmem:[%s563 + $0x31] sm:$0xff] %v1461
    %1478 = vst [vmem:[%s563 + $0x41] sm:$0xff] %v1462
    %1479 = vst [vmem:[%s563 + $0x51] sm:$0xff] %v1463
    %1480 = vst [vmem:[%s563 + $0x61] sm:$0xff] %v1464
    %1481 = vst [vmem:[%s563 + $0x71] sm:$0xff] %v1465
    %1482 = vst [vmem:[%s563 + $0xa1] sm:$0xff] %v1466
    %1483 = vst [vmem:[%s563 + $0xb1] sm:$0xff] %v1467
    %1484 = vst [vmem:[%s563 + $0xc1] sm:$0xff] %v1468
    %1485 = vst [vmem:[%s563 + $0xd1] sm:$0xff] %v1469
    %1486 = vst [vmem:[%s563 + $0xe1] sm:$0xff] %v1470
    %1487 = vst [vmem:[%s563 + $0xf1] sm:$0xff] %v1471
    %1488 = vst [vmem:[%s563 + $0x101] sm:$0xff] %v1472
    %1489 = vst [vmem:[%s563 + $0x111] sm:$0xff] %v1473
    %v1490 = vld [vmem:[#allocation2] sm:$0xff]
    %v1491 = vld [vmem:[#allocation2 + $0x10] sm:$0xff]
    %v1492 = vld [vmem:[#allocation2 + $0x20] sm:$0xff]
    %v1493 = vld [vmem:[#allocation2 + $0x30] sm:$0xff]
    %v1494 = vld [vmem:[#allocation2 + $0x40] sm:$0xff]
    %v1495 = vld [vmem:[#allocation2 + $0x50] sm:$0xff]
    %v1496 = vld [vmem:[#allocation2 + $0x60] sm:$0xff]
    %v1497 = vld [vmem:[#allocation2 + $0x70] sm:$0xff]
    %v1498 = vld [vmem:[#allocation2 + $0xa0] sm:$0xff]
    %v1499 = vld [vmem:[#allocation2 + $0xb0] sm:$0xff]
    %v1500 = vld [vmem:[#allocation2 + $0xc0] sm:$0xff]
    %v1501 = vld [vmem:[#allocation2 + $0xd0] sm:$0xff]
    %v1502 = vld [vmem:[#allocation2 + $0xe0] sm:$0xff]
    %v1503 = vld [vmem:[#allocation2 + $0xf0] sm:$0xff]
    %v1504 = vld [vmem:[#allocation2 + $0x100] sm:$0xff]
    %v1505 = vld [vmem:[#allocation2 + $0x110] sm:$0xff]
    %v1506 = vld [vmem:[#allocation2 + $0x1] sm:$0xff]
    %v1507 = vld [vmem:[#allocation2 + $0x11] sm:$0xff]
    %v1508 = vld [vmem:[#allocation2 + $0x21] sm:$0xff]
    %v1509 = vld [vmem:[#allocation2 + $0x31] sm:$0xff]
    %v1510 = vld [vmem:[#allocation2 + $0x41] sm:$0xff]
    %v1511 = vld [vmem:[#allocation2 + $0x51] sm:$0xff]
    %v1512 = vld [vmem:[#allocation2 + $0x61] sm:$0xff]
    %v1513 = vld [vmem:[#allocation2 + $0x71] sm:$0xff]
    %v1514 = vld [vmem:[#allocation2 + $0xa1] sm:$0xff]
    %v1515 = vld [vmem:[#allocation2 + $0xb1] sm:$0xff]
    %v1516 = vld [vmem:[#allocation2 + $0xc1] sm:$0xff]
    %v1517 = vld [vmem:[#allocation2 + $0xd1] sm:$0xff]
    %v1518 = vld [vmem:[#allocation2 + $0xe1] sm:$0xff]
    %v1519 = vld [vmem:[#allocation2 + $0xf1] sm:$0xff]
    %v1520 = vld [vmem:[#allocation2 + $0x101] sm:$0xff]
    %v1521 = vld [vmem:[#allocation2 + $0x111] sm:$0xff]
    %v1522 = vld [vmem:[#allocation2 + $0x2] sm:$0xff]
    %v1523 = vld [vmem:[#allocation2 + $0x12] sm:$0xff]
    %v1524 = vld [vmem:[#allocation2 + $0x22] sm:$0xff]
    %v1525 = vld [vmem:[#allocation2 + $0x32] sm:$0xff]
    %v1526 = vld [vmem:[#allocation2 + $0x42] sm:$0xff]
    %v1527 = vld [vmem:[#allocation2 + $0x52] sm:$0xff]
    %v1528 = vld [vmem:[#allocation2 + $0x62] sm:$0xff]
    %v1529 = vld [vmem:[#allocation2 + $0x72] sm:$0xff]
    %v1530 = vld [vmem:[#allocation2 + $0xa2] sm:$0xff]
    %v1531 = vld [vmem:[#allocation2 + $0xb2] sm:$0xff]
    %v1532 = vld [vmem:[#allocation2 + $0xc2] sm:$0xff]
    %v1533 = vld [vmem:[#allocation2 + $0xd2] sm:$0xff]
    %v1534 = vld [vmem:[#allocation2 + $0xe2] sm:$0xff]
    %v1535 = vld [vmem:[#allocation2 + $0xf2] sm:$0xff]
    %v1536 = vld [vmem:[#allocation2 + $0x102] sm:$0xff]
    %v1537 = vld [vmem:[#allocation2 + $0x112] sm:$0xff]
    %v1538 = vld [vmem:[%s563] sm:$0xff]
    %v1539 = vld [vmem:[%s563 + $0x10] sm:$0xff]
    %v1540 = vld [vmem:[%s563 + $0x20] sm:$0xff]
    %v1541 = vld [vmem:[%s563 + $0x30] sm:$0xff]
    %v1542 = vld [vmem:[%s563 + $0x40] sm:$0xff]
    %v1543 = vld [vmem:[%s563 + $0x50] sm:$0xff]
    %v1544 = vld [vmem:[%s563 + $0x60] sm:$0xff]
    %v1545 = vld [vmem:[%s563 + $0x70] sm:$0xff]
    %v1546 = vld [vmem:[%s563 + $0xa0] sm:$0xff]
    %v1547 = vld [vmem:[%s563 + $0xb0] sm:$0xff]
    %v1548 = vld [vmem:[%s563 + $0xc0] sm:$0xff]
    %v1549 = vld [vmem:[%s563 + $0xd0] sm:$0xff]
    %v1550 = vld [vmem:[%s563 + $0xe0] sm:$0xff]
    %v1551 = vld [vmem:[%s563 + $0xf0] sm:$0xff]
    %v1552 = vld [vmem:[%s563 + $0x100] sm:$0xff]
    %v1553 = vld [vmem:[%s563 + $0x110] sm:$0xff]
    %v1554 = vld [vmem:[%s563 + $0x1] sm:$0xff]
    %v1555 = vld [vmem:[%s563 + $0x11] sm:$0xff]
    %v1556 = vld [vmem:[%s563 + $0x21] sm:$0xff]
    %v1557 = vld [vmem:[%s563 + $0x31] sm:$0xff]
    %v1558 = vld [vmem:[%s563 + $0x41] sm:$0xff]
    %v1559 = vld [vmem:[%s563 + $0x51] sm:$0xff]
    %v1560 = vld [vmem:[%s563 + $0x61] sm:$0xff]
    %v1561 = vld [vmem:[%s563 + $0x71] sm:$0xff]
    %v1562 = vld [vmem:[%s563 + $0xa1] sm:$0xff]
    %v1563 = vld [vmem:[%s563 + $0xb1] sm:$0xff]
    %v1564 = vld [vmem:[%s563 + $0xc1] sm:$0xff]
    %v1565 = vld [vmem:[%s563 + $0xd1] sm:$0xff]
    %v1566 = vld [vmem:[%s563 + $0xe1] sm:$0xff]
    %v1567 = vld [vmem:[%s563 + $0xf1] sm:$0xff]
    %v1568 = vld [vmem:[%s563 + $0x101] sm:$0xff]
    %v1569 = vld [vmem:[%s563 + $0x111] sm:$0xff]
    %v1570 = vld [vmem:[%s563 + $0x2] sm:$0xff]
    %v1571 = vld [vmem:[%s563 + $0x12] sm:$0xff]
    %v1572 = vld [vmem:[%s563 + $0x22] sm:$0xff]
    %v1573 = vld [vmem:[%s563 + $0x32] sm:$0xff]
    %v1574 = vld [vmem:[%s563 + $0x42] sm:$0xff]
    %v1575 = vld [vmem:[%s563 + $0x52] sm:$0xff]
    %v1576 = vld [vmem:[%s563 + $0x62] sm:$0xff]
    %v1577 = vld [vmem:[%s563 + $0x72] sm:$0xff]
    %v1578 = vld [vmem:[%s563 + $0xa2] sm:$0xff]
    %v1579 = vld [vmem:[%s563 + $0xb2] sm:$0xff]
    %v1580 = vld [vmem:[%s563 + $0xc2] sm:$0xff]
    %v1581 = vld [vmem:[%s563 + $0xd2] sm:$0xff]
    %v1582 = vld [vmem:[%s563 + $0xe2] sm:$0xff]
    %v1583 = vld [vmem:[%s563 + $0xf2] sm:$0xff]
    %v1584 = vld [vmem:[%s563 + $0x102] sm:$0xff]
    %v1585 = vld [vmem:[%s563 + $0x112] sm:$0xff]
    %v1586 = vld [vmem:[%s676] sm:$0xff]
    %v1587 = vld [vmem:[%s676 + $0x10] sm:$0xff]
    %v1588 = vld [vmem:[%s676 + $0x20] sm:$0xff]
    %v1589 = vld [vmem:[%s676 + $0x30] sm:$0xff]
    %v1590 = vld [vmem:[%s676 + $0x40] sm:$0xff]
    %v1591 = vld [vmem:[%s676 + $0x50] sm:$0xff]
    %v1592 = vld [vmem:[%s676 + $0x60] sm:$0xff]
    %v1593 = vld [vmem:[%s676 + $0x70] sm:$0xff]
    %v1594 = vld [vmem:[%s676 + $0xa0] sm:$0xff]
    %v1595 = vld [vmem:[%s676 + $0xb0] sm:$0xff]
    %v1596 = vld [vmem:[%s676 + $0xc0] sm:$0xff]
    %v1597 = vld [vmem:[%s676 + $0xd0] sm:$0xff]
    %v1598 = vld [vmem:[%s676 + $0xe0] sm:$0xff]
    %v1599 = vld [vmem:[%s676 + $0xf0] sm:$0xff]
    %v1600 = vld [vmem:[%s676 + $0x100] sm:$0xff]
    %v1601 = vld [vmem:[%s676 + $0x110] sm:$0xff]
    %v1602 = vld [vmem:[%s676 + $0x1] sm:$0xff]
    %v1603 = vld [vmem:[%s676 + $0x11] sm:$0xff]
    %v1604 = vld [vmem:[%s676 + $0x21] sm:$0xff]
    %v1605 = vld [vmem:[%s676 + $0x31] sm:$0xff]
    %v1606 = vld [vmem:[%s676 + $0x41] sm:$0xff]
    %v1607 = vld [vmem:[%s676 + $0x51] sm:$0xff]
    %v1608 = vld [vmem:[%s676 + $0x61] sm:$0xff]
    %v1609 = vld [vmem:[%s676 + $0x71] sm:$0xff]
    %v1610 = vld [vmem:[%s676 + $0xa1] sm:$0xff]
    %v1611 = vld [vmem:[%s676 + $0xb1] sm:$0xff]
    %v1612 = vld [vmem:[%s676 + $0xc1] sm:$0xff]
    %v1613 = vld [vmem:[%s676 + $0xd1] sm:$0xff]
    %v1614 = vld [vmem:[%s676 + $0xe1] sm:$0xff]
    %v1615 = vld [vmem:[%s676 + $0xf1] sm:$0xff]
    %v1616 = vld [vmem:[%s676 + $0x101] sm:$0xff]
    %v1617 = vld [vmem:[%s676 + $0x111] sm:$0xff]
    %v1618 = vld [vmem:[%s676 + $0x2] sm:$0xff]
    %v1619 = vld [vmem:[%s676 + $0x12] sm:$0xff]
    %v1620 = vld [vmem:[%s676 + $0x22] sm:$0xff]
    %v1621 = vld [vmem:[%s676 + $0x32] sm:$0xff]
    %v1622 = vld [vmem:[%s676 + $0x42] sm:$0xff]
    %v1623 = vld [vmem:[%s676 + $0x52] sm:$0xff]
    %v1624 = vld [vmem:[%s676 + $0x62] sm:$0xff]
    %v1625 = vld [vmem:[%s676 + $0x72] sm:$0xff]
    %v1626 = vld [vmem:[%s676 + $0xa2] sm:$0xff]
    %v1627 = vld [vmem:[%s676 + $0xb2] sm:$0xff]
    %v1628 = vld [vmem:[%s676 + $0xc2] sm:$0xff]
    %v1629 = vld [vmem:[%s676 + $0xd2] sm:$0xff]
    %v1630 = vld [vmem:[%s676 + $0xe2] sm:$0xff]
    %v1631 = vld [vmem:[%s676 + $0xf2] sm:$0xff]
    %v1632 = vld [vmem:[%s676 + $0x102] sm:$0xff]
    %v1633 = vld [vmem:[%s676 + $0x112] sm:$0xff]
    %v1634 = vld [vmem:[#allocation8] sm:$0xff]
    %v1635 = vld [vmem:[#allocation8 + $0x8] sm:$0xff]
    %v1636 = vld [vmem:[#allocation8 + $0x10] sm:$0xff]
    %v1637 = vld [vmem:[#allocation8 + $0x18] sm:$0xff]
    %v1638 = vld [vmem:[#allocation8 + $0x20] sm:$0xff]
    %v1639 = vld [vmem:[#allocation8 + $0x28] sm:$0xff]
    %v1640 = vld [vmem:[#allocation8 + $0x30] sm:$0xff]
    %v1641 = vld [vmem:[#allocation8 + $0x38] sm:$0xff]
    %v1642 = vld [vmem:[#allocation8 + $0x40] sm:$0xff]
    %v1643 = vld [vmem:[#allocation8 + $0x48] sm:$0xff]
    %v1644 = vld [vmem:[#allocation8 + $0x50] sm:$0xff]
    %v1645 = vld [vmem:[#allocation8 + $0x58] sm:$0xff]
    %v1646 = vld [vmem:[#allocation8 + $0x60] sm:$0xff]
    %v1647 = vld [vmem:[#allocation8 + $0x68] sm:$0xff]
    %v1648 = vld [vmem:[#allocation8 + $0x70] sm:$0xff]
    %v1649 = vld [vmem:[#allocation8 + $0x78] sm:$0xff]
    %v1650 = vld [vmem:[#allocation8 + $0x80] sm:$0xff]
    %v1651 = vld [vmem:[#allocation8 + $0x88] sm:$0xff]
    %v1652 = vld [vmem:[#allocation8 + $0x90] sm:$0xff]
    %v1653 = vld [vmem:[#allocation8 + $0x98] sm:$0xff]
    %v1654 = vld [vmem:[#allocation8 + $0xa0] sm:$0xff]
    %v1655 = vld [vmem:[#allocation8 + $0xa8] sm:$0xff]
    %v1656 = vld [vmem:[#allocation8 + $0xb0] sm:$0xff]
    %v1657 = vld [vmem:[#allocation8 + $0xb8] sm:$0xff]
    %v1658 = vld [vmem:[#allocation8 + $0xc0] sm:$0xff]
    %v1659 = vld [vmem:[#allocation8 + $0xc8] sm:$0xff]
    %v1660 = vld [vmem:[#allocation8 + $0xd0] sm:$0xff]
    %v1661 = vld [vmem:[#allocation8 + $0xd8] sm:$0xff]
    %v1662 = vld [vmem:[#allocation8 + $0xe0] sm:$0xff]
    %v1663 = vld [vmem:[#allocation8 + $0xe8] sm:$0xff]
    %v1664 = vld [vmem:[#allocation8 + $0xf0] sm:$0xff]
    %v1665 = vld [vmem:[#allocation8 + $0xf8] sm:$0xff]
    %v1666 = vld [vmem:[#allocation8 + $0x100] sm:$0xff]
    %v1667 = vld [vmem:[#allocation8 + $0x108] sm:$0xff]
    %v1668 = vld [vmem:[#allocation8 + $0x110] sm:$0xff]
    %v1669 = vld [vmem:[#allocation8 + $0x118] sm:$0xff]
    %v1670 = vld [vmem:[#allocation8 + $0x120] sm:$0xff]
    %v1671 = vld [vmem:[#allocation8 + $0x128] sm:$0xff]
    %v1672 = vld [vmem:[#allocation8 + $0x130] sm:$0xff]
    %v1673 = vld [vmem:[#allocation8 + $0x138] sm:$0xff]
    %v1674 = vld [vmem:[#allocation8 + $0x140] sm:$0xff]
    %v1675 = vld [vmem:[#allocation8 + $0x148] sm:$0xff]
    %v1676 = vld [vmem:[#allocation8 + $0x150] sm:$0xff]
    %v1677 = vld [vmem:[#allocation8 + $0x158] sm:$0xff]
    %v1678 = vld [vmem:[#allocation8 + $0x160] sm:$0xff]
    %v1679 = vld [vmem:[#allocation8 + $0x168] sm:$0xff]
    %v1680 = vld [vmem:[#allocation8 + $0x170] sm:$0xff]
    %v1681 = vld [vmem:[#allocation8 + $0x178] sm:$0xff]
    %v1682 = vld [vmem:[#allocation8 + $0x180] sm:$0xff]
    %v1683 = vld [vmem:[#allocation8 + $0x188] sm:$0xff]
    %v1684 = vld [vmem:[#allocation8 + $0x190] sm:$0xff]
    %v1685 = vld [vmem:[#allocation8 + $0x198] sm:$0xff]
    %v1686 = vld [vmem:[#allocation8 + $0x1a0] sm:$0xff]
    %v1687 = vld [vmem:[#allocation8 + $0x1a8] sm:$0xff]
    %v1688 = vld [vmem:[#allocation8 + $0x1b0] sm:$0xff]
    %v1689 = vld [vmem:[#allocation8 + $0x1b8] sm:$0xff]
    %v1690 = vld [vmem:[#allocation8 + $0x1c0] sm:$0xff]
    %v1691 = vld [vmem:[#allocation8 + $0x1c8] sm:$0xff]
    %v1692 = vld [vmem:[#allocation8 + $0x1d0] sm:$0xff]
    %v1693 = vld [vmem:[#allocation8 + $0x1d8] sm:$0xff]
    %v1694 = vld [vmem:[#allocation8 + $0x1e0] sm:$0xff]
    %v1695 = vld [vmem:[#allocation8 + $0x1e8] sm:$0xff]
    %v1696 = vld [vmem:[#allocation8 + $0x1f0] sm:$0xff]
    %v1697 = vld [vmem:[#allocation8 + $0x1f8] sm:$0xff]
    %v1698 = vld [vmem:[#allocation8 + $0x200] sm:$0xff]
    %v1699 = vld [vmem:[#allocation8 + $0x208] sm:$0xff]
    %v1700 = vld [vmem:[#allocation8 + $0x210] sm:$0xff]
    %v1701 = vld [vmem:[#allocation8 + $0x218] sm:$0xff]
    %v1702 = vld [vmem:[#allocation8 + $0x220] sm:$0xff]
    %v1703 = vld [vmem:[#allocation8 + $0x228] sm:$0xff]
    %v1704 = vld [vmem:[#allocation8 + $0x230] sm:$0xff]
    %v1705 = vld [vmem:[#allocation8 + $0x238] sm:$0xff]
    %v1706 = vld [vmem:[#allocation8 + $0x240] sm:$0xff]
    %v1707 = vld [vmem:[#allocation8 + $0x248] sm:$0xff]
    %v1708 = vld [vmem:[#allocation8 + $0x250] sm:$0xff]
    %v1709 = vld [vmem:[#allocation8 + $0x258] sm:$0xff]
    %v1710 = vld [vmem:[#allocation8 + $0x260] sm:$0xff]
    %v1711 = vld [vmem:[#allocation8 + $0x268] sm:$0xff]
    %v1712 = vld [vmem:[#allocation8 + $0x270] sm:$0xff]
    %v1713 = vld [vmem:[#allocation8 + $0x278] sm:$0xff]
    %v1714 = vld [vmem:[#allocation8 + $0x280] sm:$0xff]
    %v1715 = vld [vmem:[#allocation8 + $0x288] sm:$0xff]
    %v1716 = vld [vmem:[#allocation8 + $0x290] sm:$0xff]
    %v1717 = vld [vmem:[#allocation8 + $0x298] sm:$0xff]
    %v1718 = vld [vmem:[#allocation8 + $0x2a0] sm:$0xff]
    %v1719 = vld [vmem:[#allocation8 + $0x2a8] sm:$0xff]
    %v1720 = vld [vmem:[#allocation8 + $0x2b0] sm:$0xff]
    %v1721 = vld [vmem:[#allocation8 + $0x2b8] sm:$0xff]
    %v1722 = vld [vmem:[#allocation8 + $0x2c0] sm:$0xff]
    %v1723 = vld [vmem:[#allocation8 + $0x2c8] sm:$0xff]
    %v1724 = vld [vmem:[#allocation8 + $0x2d0] sm:$0xff]
    %v1725 = vld [vmem:[#allocation8 + $0x2d8] sm:$0xff]
    %v1726 = vld [vmem:[#allocation8 + $0x2e0] sm:$0xff]
    %v1727 = vld [vmem:[#allocation8 + $0x2e8] sm:$0xff]
    %v1728 = vld [vmem:[#allocation8 + $0x2f0] sm:$0xff]
    %v1729 = vld [vmem:[#allocation8 + $0x2f8] sm:$0xff]
    %v1730 = vld [vmem:[#allocation8 + $0x300] sm:$0xff]
    %v1731 = vld [vmem:[#allocation8 + $0x308] sm:$0xff]
    %v1732 = vld [vmem:[#allocation8 + $0x310] sm:$0xff]
    %v1733 = vld [vmem:[#allocation8 + $0x318] sm:$0xff]
    %v1734 = vld [vmem:[#allocation8 + $0x320] sm:$0xff]
    %v1735 = vld [vmem:[#allocation8 + $0x328] sm:$0xff]
    %v1736 = vld [vmem:[#allocation8 + $0x330] sm:$0xff]
    %v1737 = vld [vmem:[#allocation8 + $0x338] sm:$0xff]
    %v1738 = vld [vmem:[#allocation8 + $0x340] sm:$0xff]
    %v1739 = vld [vmem:[#allocation8 + $0x348] sm:$0xff]
    %v1740 = vld [vmem:[#allocation8 + $0x350] sm:$0xff]
    %v1741 = vld [vmem:[#allocation8 + $0x358] sm:$0xff]
    %v1742 = vld [vmem:[#allocation8 + $0x360] sm:$0xff]
    %v1743 = vld [vmem:[#allocation8 + $0x368] sm:$0xff]
    %v1744 = vld [vmem:[#allocation8 + $0x370] sm:$0xff]
    %v1745 = vld [vmem:[#allocation8 + $0x378] sm:$0xff]
    %v1746 = vld [vmem:[#allocation8 + $0x380] sm:$0xff]
    %v1747 = vld [vmem:[#allocation8 + $0x388] sm:$0xff]
    %v1748 = vld [vmem:[#allocation8 + $0x390] sm:$0xff]
    %v1749 = vld [vmem:[#allocation8 + $0x398] sm:$0xff]
    %v1750 = vld [vmem:[#allocation8 + $0x3a0] sm:$0xff]
    %v1751 = vld [vmem:[#allocation8 + $0x3a8] sm:$0xff]
    %v1752 = vld [vmem:[#allocation8 + $0x3b0] sm:$0xff]
    %v1753 = vld [vmem:[#allocation8 + $0x3b8] sm:$0xff]
    %v1754 = vld [vmem:[#allocation8 + $0x3c0] sm:$0xff]
    %v1755 = vld [vmem:[#allocation8 + $0x3c8] sm:$0xff]
    %v1756 = vld [vmem:[#allocation8 + $0x3d0] sm:$0xff]
    %v1757 = vld [vmem:[#allocation8 + $0x3d8] sm:$0xff]
    %v1758 = vld [vmem:[#allocation8 + $0x3e0] sm:$0xff]
    %v1759 = vld [vmem:[#allocation8 + $0x3e8] sm:$0xff]
    %v1760 = vld [vmem:[#allocation8 + $0x3f0] sm:$0xff]
    %v1761 = vld [vmem:[#allocation8 + $0x3f8] sm:$0xff]
    %v1762 = vld [vmem:[#allocation8 + $0x400] sm:$0xff]
    %v1763 = vld [vmem:[#allocation8 + $0x408] sm:$0xff]
    %v1764 = vld [vmem:[#allocation8 + $0x410] sm:$0xff]
    %v1765 = vld [vmem:[#allocation8 + $0x418] sm:$0xff]
    %v1766 = vld [vmem:[#allocation8 + $0x420] sm:$0xff]
    %v1767 = vld [vmem:[#allocation8 + $0x428] sm:$0xff]
    %v1768 = vld [vmem:[#allocation8 + $0x430] sm:$0xff]
    %v1769 = vld [vmem:[#allocation8 + $0x438] sm:$0xff]
    %v1770 = vld [vmem:[#allocation8 + $0x440] sm:$0xff]
    %v1771 = vld [vmem:[#allocation8 + $0x448] sm:$0xff]
    %v1772 = vld [vmem:[#allocation8 + $0x450] sm:$0xff]
    %v1773 = vld [vmem:[#allocation8 + $0x458] sm:$0xff]
    %v1774 = vld [vmem:[#allocation8 + $0x460] sm:$0xff]
    %v1775 = vld [vmem:[#allocation8 + $0x468] sm:$0xff]
    %v1776 = vld [vmem:[#allocation8 + $0x470] sm:$0xff]
    %v1777 = vld [vmem:[#allocation8 + $0x478] sm:$0xff]
    %v1778 = vld [vmem:[%s4] sm:$0x1]
    %v1780 = vperm.slane %v1778, 0
    %1782 = vmatpush.msra.mxu0 %v1649
    %1783 = vmatpush.msra.mxu0 %v1648
    %1784 = vmatpush.msra.mxu0 %v1647
    %1785 = vmatpush.msra.mxu0 %v1646
    %1786 = vmatpush.msra.mxu0 %v1645
    %1787 = vmatpush.msra.mxu0 %v1644
    %1788 = vmatpush.msra.mxu0 %v1643
    %1789 = vmatpush.msra.mxu0 %v1642
    %1790 = vmatpush.msra.mxu0 %v1641
    %1791 = vmatpush.msra.mxu0 %v1640
    %1792 = vmatpush.msra.mxu0 %v1639
    %1793 = vmatpush.msra.mxu0 %v1638
    %1794 = vmatpush.msra.mxu0 %v1637
    %1795 = vmatpush.msra.mxu0 %v1636
    %1796 = vmatpush.msra.mxu0 %v1635
    %1797 = vmatpush.msra.mxu0 %v1634
    %1798 = vmatmul.f32.gmra.mxu0 %v1490
    %v1799 = vpop.f32.mrf.mxu0
    %v1800 = vadd.f32 %v1780, %v1799
    %1801 = vmatmul.f32.gmra.mxu0 %v1491
    %v1802 = vpop.f32.mrf.mxu0
    %v1803 = vadd.f32 %v1780, %v1802
    %1804 = vmatmul.f32.gmra.mxu0 %v1492
    %v1805 = vpop.f32.mrf.mxu0
    %v1806 = vadd.f32 %v1780, %v1805
    %1807 = vmatmul.f32.gmra.mxu0 %v1493
    %v1808 = vpop.f32.mrf.mxu0
    %v1809 = vadd.f32 %v1780, %v1808
    %1810 = vmatmul.f32.gmra.mxu0 %v1494
    %v1811 = vpop.f32.mrf.mxu0
    %v1812 = vadd.f32 %v1780, %v1811
    %1813 = vmatmul.f32.gmra.mxu0 %v1495
    %v1814 = vpop.f32.mrf.mxu0
    %v1815 = vadd.f32 %v1780, %v1814
    %1816 = vmatmul.f32.gmra.mxu0 %v1496
    %v1817 = vpop.f32.mrf.mxu0
    %v1818 = vadd.f32 %v1780, %v1817
    %1819 = vmatmul.f32.gmra.mxu0 %v1497
    %v1820 = vpop.f32.mrf.mxu0
    %v1821 = vadd.f32 %v1780, %v1820
    %1822 = vmatmul.f32.gmra.mxu0 %v1498
    %v1823 = vpop.f32.mrf.mxu0
    %v1824 = vadd.f32 %v1780, %v1823
    %1825 = vmatmul.f32.gmra.mxu0 %v1499
    %v1826 = vpop.f32.mrf.mxu0
    %v1827 = vadd.f32 %v1780, %v1826
    %1828 = vmatmul.f32.gmra.mxu0 %v1500
    %v1829 = vpop.f32.mrf.mxu0
    %v1830 = vadd.f32 %v1780, %v1829
    %1831 = vmatmul.f32.gmra.mxu0 %v1501
    %v1832 = vpop.f32.mrf.mxu0
    %v1833 = vadd.f32 %v1780, %v1832
    %1834 = vmatmul.f32.gmra.mxu0 %v1502
    %v1835 = vpop.f32.mrf.mxu0
    %v1836 = vadd.f32 %v1780, %v1835
    %1837 = vmatmul.f32.gmra.mxu0 %v1503
    %v1838 = vpop.f32.mrf.mxu0
    %v1839 = vadd.f32 %v1780, %v1838
    %1840 = vmatmul.f32.gmra.mxu0 %v1504
    %v1841 = vpop.f32.mrf.mxu0
    %v1842 = vadd.f32 %v1780, %v1841
    %1843 = vmatmul.f32.gmra.mxu0 %v1505
    %v1844 = vpop.f32.mrf.mxu0
    %v1845 = vadd.f32 %v1780, %v1844
    %1846 = vdwg.mxu0
    %1847 = vmatpush.msra.mxu0 %v1665
    %1848 = vmatpush.msra.mxu0 %v1664
    %1849 = vmatpush.msra.mxu0 %v1663
    %1850 = vmatpush.msra.mxu0 %v1662
    %1851 = vmatpush.msra.mxu0 %v1661
    %1852 = vmatpush.msra.mxu0 %v1660
    %1853 = vmatpush.msra.mxu0 %v1659
    %1854 = vmatpush.msra.mxu0 %v1658
    %1855 = vmatpush.msra.mxu0 %v1657
    %1856 = vmatpush.msra.mxu0 %v1656
    %1857 = vmatpush.msra.mxu0 %v1655
    %1858 = vmatpush.msra.mxu0 %v1654
    %1859 = vmatpush.msra.mxu0 %v1653
    %1860 = vmatpush.msra.mxu0 %v1652
    %1861 = vmatpush.msra.mxu0 %v1651
    %1862 = vmatpush.msra.mxu0 %v1650
    %1863 = vmatmul.f32.gmra.mxu0 %v1506
    %v1864 = vpop.f32.mrf.mxu0
    %v1865 = vadd.f32 %v1800, %v1864
    %1866 = vmatmul.f32.gmra.mxu0 %v1507
    %v1867 = vpop.f32.mrf.mxu0
    %v1868 = vadd.f32 %v1803, %v1867
    %1869 = vmatmul.f32.gmra.mxu0 %v1508
    %v1870 = vpop.f32.mrf.mxu0
    %v1871 = vadd.f32 %v1806, %v1870
    %1872 = vmatmul.f32.gmra.mxu0 %v1509
    %v1873 = vpop.f32.mrf.mxu0
    %v1874 = vadd.f32 %v1809, %v1873
    %1875 = vmatmul.f32.gmra.mxu0 %v1510
    %v1876 = vpop.f32.mrf.mxu0
    %v1877 = vadd.f32 %v1812, %v1876
    %1878 = vmatmul.f32.gmra.mxu0 %v1511
    %v1879 = vpop.f32.mrf.mxu0
    %v1880 = vadd.f32 %v1815, %v1879
    %1881 = vmatmul.f32.gmra.mxu0 %v1512
    %v1882 = vpop.f32.mrf.mxu0
    %v1883 = vadd.f32 %v1818, %v1882
    %1884 = vmatmul.f32.gmra.mxu0 %v1513
    %v1885 = vpop.f32.mrf.mxu0
    %v1886 = vadd.f32 %v1821, %v1885
    %1887 = vmatmul.f32.gmra.mxu0 %v1514
    %v1888 = vpop.f32.mrf.mxu0
    %v1889 = vadd.f32 %v1824, %v1888
    %1890 = vmatmul.f32.gmra.mxu0 %v1515
    %v1891 = vpop.f32.mrf.mxu0
    %v1892 = vadd.f32 %v1827, %v1891
    %1893 = vmatmul.f32.gmra.mxu0 %v1516
    %v1894 = vpop.f32.mrf.mxu0
    %v1895 = vadd.f32 %v1830, %v1894
    %1896 = vmatmul.f32.gmra.mxu0 %v1517
    %v1897 = vpop.f32.mrf.mxu0
    %v1898 = vadd.f32 %v1833, %v1897
    %1899 = vmatmul.f32.gmra.mxu0 %v1518
    %v1900 = vpop.f32.mrf.mxu0
    %v1901 = vadd.f32 %v1836, %v1900
    %1902 = vmatmul.f32.gmra.mxu0 %v1519
    %v1903 = vpop.f32.mrf.mxu0
    %v1904 = vadd.f32 %v1839, %v1903
    %1905 = vmatmul.f32.gmra.mxu0 %v1520
    %v1906 = vpop.f32.mrf.mxu0
    %v1907 = vadd.f32 %v1842, %v1906
    %1908 = vmatmul.f32.gmra.mxu0 %v1521
    %v1909 = vpop.f32.mrf.mxu0
    %v1910 = vadd.f32 %v1845, %v1909
    %1911 = vdwg.mxu0
    %1912 = vmatpush.msra.mxu0 %v1681
    %1913 = vmatpush.msra.mxu0 %v1680
    %1914 = vmatpush.msra.mxu0 %v1679
    %1915 = vmatpush.msra.mxu0 %v1678
    %1916 = vmatpush.msra.mxu0 %v1677
    %1917 = vmatpush.msra.mxu0 %v1676
    %1918 = vmatpush.msra.mxu0 %v1675
    %1919 = vmatpush.msra.mxu0 %v1674
    %1920 = vmatpush.msra.mxu0 %v1673
    %1921 = vmatpush.msra.mxu0 %v1672
    %1922 = vmatpush.msra.mxu0 %v1671
    %1923 = vmatpush.msra.mxu0 %v1670
    %1924 = vmatpush.msra.mxu0 %v1669
    %1925 = vmatpush.msra.mxu0 %v1668
    %1926 = vmatpush.msra.mxu0 %v1667
    %1927 = vmatpush.msra.mxu0 %v1666
    %1928 = vmatmul.f32.gmra.mxu0 %v1522
    %v1929 = vpop.f32.mrf.mxu0
    %v1930 = vadd.f32 %v1865, %v1929
    %1931 = vmatmul.f32.gmra.mxu0 %v1523
    %v1932 = vpop.f32.mrf.mxu0
    %v1933 = vadd.f32 %v1868, %v1932
    %1934 = vmatmul.f32.gmra.mxu0 %v1524
    %v1935 = vpop.f32.mrf.mxu0
    %v1936 = vadd.f32 %v1871, %v1935
    %1937 = vmatmul.f32.gmra.mxu0 %v1525
    %v1938 = vpop.f32.mrf.mxu0
    %v1939 = vadd.f32 %v1874, %v1938
    %1940 = vmatmul.f32.gmra.mxu0 %v1526
    %v1941 = vpop.f32.mrf.mxu0
    %v1942 = vadd.f32 %v1877, %v1941
    %1943 = vmatmul.f32.gmra.mxu0 %v1527
    %v1944 = vpop.f32.mrf.mxu0
    %v1945 = vadd.f32 %v1880, %v1944
    %1946 = vmatmul.f32.gmra.mxu0 %v1528
    %v1947 = vpop.f32.mrf.mxu0
    %v1948 = vadd.f32 %v1883, %v1947
    %1949 = vmatmul.f32.gmra.mxu0 %v1529
    %v1950 = vpop.f32.mrf.mxu0
    %v1951 = vadd.f32 %v1886, %v1950
    %1952 = vmatmul.f32.gmra.mxu0 %v1530
    %v1953 = vpop.f32.mrf.mxu0
    %v1954 = vadd.f32 %v1889, %v1953
    %1955 = vmatmul.f32.gmra.mxu0 %v1531
    %v1956 = vpop.f32.mrf.mxu0
    %v1957 = vadd.f32 %v1892, %v1956
    %1958 = vmatmul.f32.gmra.mxu0 %v1532
    %v1959 = vpop.f32.mrf.mxu0
    %v1960 = vadd.f32 %v1895, %v1959
    %1961 = vmatmul.f32.gmra.mxu0 %v1533
    %v1962 = vpop.f32.mrf.mxu0
    %v1963 = vadd.f32 %v1898, %v1962
    %1964 = vmatmul.f32.gmra.mxu0 %v1534
    %v1965 = vpop.f32.mrf.mxu0
    %v1966 = vadd.f32 %v1901, %v1965
    %1967 = vmatmul.f32.gmra.mxu0 %v1535
    %v1968 = vpop.f32.mrf.mxu0
    %v1969 = vadd.f32 %v1904, %v1968
    %1970 = vmatmul.f32.gmra.mxu0 %v1536
    %v1971 = vpop.f32.mrf.mxu0
    %v1972 = vadd.f32 %v1907, %v1971
    %1973 = vmatmul.f32.gmra.mxu0 %v1537
    %v1974 = vpop.f32.mrf.mxu0
    %v1975 = vadd.f32 %v1910, %v1974
    %1976 = vdwg.mxu0
    %1977 = vmatpush.msra.mxu0 %v1697
    %1978 = vmatpush.msra.mxu0 %v1696
    %1979 = vmatpush.msra.mxu0 %v1695
    %1980 = vmatpush.msra.mxu0 %v1694
    %1981 = vmatpush.msra.mxu0 %v1693
    %1982 = vmatpush.msra.mxu0 %v1692
    %1983 = vmatpush.msra.mxu0 %v1691
    %1984 = vmatpush.msra.mxu0 %v1690
    %1985 = vmatpush.msra.mxu0 %v1689
    %1986 = vmatpush.msra.mxu0 %v1688
    %1987 = vmatpush.msra.mxu0 %v1687
    %1988 = vmatpush.msra.mxu0 %v1686
    %1989 = vmatpush.msra.mxu0 %v1685
    %1990 = vmatpush.msra.mxu0 %v1684
    %1991 = vmatpush.msra.mxu0 %v1683
    %1992 = vmatpush.msra.mxu0 %v1682
    %1993 = vmatmul.f32.gmra.mxu0 %v1538
    %v1994 = vpop.f32.mrf.mxu0
    %v1995 = vadd.f32 %v1930, %v1994
    %1996 = vmatmul.f32.gmra.mxu0 %v1539
    %v1997 = vpop.f32.mrf.mxu0
    %v1998 = vadd.f32 %v1933, %v1997
    %1999 = vmatmul.f32.gmra.mxu0 %v1540
    %v2000 = vpop.f32.mrf.mxu0
    %v2001 = vadd.f32 %v1936, %v2000
    %2002 = vmatmul.f32.gmra.mxu0 %v1541
    %v2003 = vpop.f32.mrf.mxu0
    %v2004 = vadd.f32 %v1939, %v2003
    %2005 = vmatmul.f32.gmra.mxu0 %v1542
    %v2006 = vpop.f32.mrf.mxu0
    %v2007 = vadd.f32 %v1942, %v2006
    %2008 = vmatmul.f32.gmra.mxu0 %v1543
    %v2009 = vpop.f32.mrf.mxu0
    %v2010 = vadd.f32 %v1945, %v2009
    %2011 = vmatmul.f32.gmra.mxu0 %v1544
    %v2012 = vpop.f32.mrf.mxu0
    %v2013 = vadd.f32 %v1948, %v2012
    %2014 = vmatmul.f32.gmra.mxu0 %v1545
    %v2015 = vpop.f32.mrf.mxu0
    %v2016 = vadd.f32 %v1951, %v2015
    %2017 = vmatmul.f32.gmra.mxu0 %v1546
    %v2018 = vpop.f32.mrf.mxu0
    %v2019 = vadd.f32 %v1954, %v2018
    %2020 = vmatmul.f32.gmra.mxu0 %v1547
    %v2021 = vpop.f32.mrf.mxu0
    %v2022 = vadd.f32 %v1957, %v2021
    %2023 = vmatmul.f32.gmra.mxu0 %v1548
    %v2024 = vpop.f32.mrf.mxu0
    %v2025 = vadd.f32 %v1960, %v2024
    %2026 = vmatmul.f32.gmra.mxu0 %v1549
    %v2027 = vpop.f32.mrf.mxu0
    %v2028 = vadd.f32 %v1963, %v2027
    %2029 = vmatmul.f32.gmra.mxu0 %v1550
    %v2030 = vpop.f32.mrf.mxu0
    %v2031 = vadd.f32 %v1966, %v2030
    %2032 = vmatmul.f32.gmra.mxu0 %v1551
    %v2033 = vpop.f32.mrf.mxu0
    %v2034 = vadd.f32 %v1969, %v2033
    %2035 = vmatmul.f32.gmra.mxu0 %v1552
    %v2036 = vpop.f32.mrf.mxu0
    %v2037 = vadd.f32 %v1972, %v2036
    %2038 = vmatmul.f32.gmra.mxu0 %v1553
    %v2039 = vpop.f32.mrf.mxu0
    %v2040 = vadd.f32 %v1975, %v2039
    %2041 = vdwg.mxu0
    %2042 = vmatpush.msra.mxu0 %v1713
    %2043 = vmatpush.msra.mxu0 %v1712
    %2044 = vmatpush.msra.mxu0 %v1711
    %2045 = vmatpush.msra.mxu0 %v1710
    %2046 = vmatpush.msra.mxu0 %v1709
    %2047 = vmatpush.msra.mxu0 %v1708
    %2048 = vmatpush.msra.mxu0 %v1707
    %2049 = vmatpush.msra.mxu0 %v1706
    %2050 = vmatpush.msra.mxu0 %v1705
    %2051 = vmatpush.msra.mxu0 %v1704
    %2052 = vmatpush.msra.mxu0 %v1703
    %2053 = vmatpush.msra.mxu0 %v1702
    %2054 = vmatpush.msra.mxu0 %v1701
    %2055 = vmatpush.msra.mxu0 %v1700
    %2056 = vmatpush.msra.mxu0 %v1699
    %2057 = vmatpush.msra.mxu0 %v1698
    %2058 = vmatmul.f32.gmra.mxu0 %v1554
    %v2059 = vpop.f32.mrf.mxu0
    %v2060 = vadd.f32 %v1995, %v2059
    %2061 = vmatmul.f32.gmra.mxu0 %v1555
    %v2062 = vpop.f32.mrf.mxu0
    %v2063 = vadd.f32 %v1998, %v2062
    %2064 = vmatmul.f32.gmra.mxu0 %v1556
    %v2065 = vpop.f32.mrf.mxu0
    %v2066 = vadd.f32 %v2001, %v2065
    %2067 = vmatmul.f32.gmra.mxu0 %v1557
    %v2068 = vpop.f32.mrf.mxu0
    %v2069 = vadd.f32 %v2004, %v2068
    %2070 = vmatmul.f32.gmra.mxu0 %v1558
    %v2071 = vpop.f32.mrf.mxu0
    %v2072 = vadd.f32 %v2007, %v2071
    %2073 = vmatmul.f32.gmra.mxu0 %v1559
    %v2074 = vpop.f32.mrf.mxu0
    %v2075 = vadd.f32 %v2010, %v2074
    %2076 = vmatmul.f32.gmra.mxu0 %v1560
    %v2077 = vpop.f32.mrf.mxu0
    %v2078 = vadd.f32 %v2013, %v2077
    %2079 = vmatmul.f32.gmra.mxu0 %v1561
    %v2080 = vpop.f32.mrf.mxu0
    %v2081 = vadd.f32 %v2016, %v2080
    %2082 = vmatmul.f32.gmra.mxu0 %v1562
    %v2083 = vpop.f32.mrf.mxu0
    %v2084 = vadd.f32 %v2019, %v2083
    %2085 = vmatmul.f32.gmra.mxu0 %v1563
    %v2086 = vpop.f32.mrf.mxu0
    %v2087 = vadd.f32 %v2022, %v2086
    %2088 = vmatmul.f32.gmra.mxu0 %v1564
    %v2089 = vpop.f32.mrf.mxu0
    %v2090 = vadd.f32 %v2025, %v2089
    %2091 = vmatmul.f32.gmra.mxu0 %v1565
    %v2092 = vpop.f32.mrf.mxu0
    %v2093 = vadd.f32 %v2028, %v2092
    %2094 = vmatmul.f32.gmra.mxu0 %v1566
    %v2095 = vpop.f32.mrf.mxu0
    %v2096 = vadd.f32 %v2031, %v2095
    %2097 = vmatmul.f32.gmra.mxu0 %v1567
    %v2098 = vpop.f32.mrf.mxu0
    %v2099 = vadd.f32 %v2034, %v2098
    %2100 = vmatmul.f32.gmra.mxu0 %v1568
    %v2101 = vpop.f32.mrf.mxu0
    %v2102 = vadd.f32 %v2037, %v2101
    %2103 = vmatmul.f32.gmra.mxu0 %v1569
    %v2104 = vpop.f32.mrf.mxu0
    %v2105 = vadd.f32 %v2040, %v2104
    %2106 = vdwg.mxu0
    %2107 = vmatpush.msra.mxu0 %v1729
    %2108 = vmatpush.msra.mxu0 %v1728
    %2109 = vmatpush.msra.mxu0 %v1727
    %2110 = vmatpush.msra.mxu0 %v1726
    %2111 = vmatpush.msra.mxu0 %v1725
    %2112 = vmatpush.msra.mxu0 %v1724
    %2113 = vmatpush.msra.mxu0 %v1723
    %2114 = vmatpush.msra.mxu0 %v1722
    %2115 = vmatpush.msra.mxu0 %v1721
    %2116 = vmatpush.msra.mxu0 %v1720
    %2117 = vmatpush.msra.mxu0 %v1719
    %2118 = vmatpush.msra.mxu0 %v1718
    %2119 = vmatpush.msra.mxu0 %v1717
    %2120 = vmatpush.msra.mxu0 %v1716
    %2121 = vmatpush.msra.mxu0 %v1715
    %2122 = vmatpush.msra.mxu0 %v1714
    %2123 = vmatmul.f32.gmra.mxu0 %v1570
    %v2124 = vpop.f32.mrf.mxu0
    %v2125 = vadd.f32 %v2060, %v2124
    %2126 = vmatmul.f32.gmra.mxu0 %v1571
    %v2127 = vpop.f32.mrf.mxu0
    %v2128 = vadd.f32 %v2063, %v2127
    %2129 = vmatmul.f32.gmra.mxu0 %v1572
    %v2130 = vpop.f32.mrf.mxu0
    %v2131 = vadd.f32 %v2066, %v2130
    %2132 = vmatmul.f32.gmra.mxu0 %v1573
    %v2133 = vpop.f32.mrf.mxu0
    %v2134 = vadd.f32 %v2069, %v2133
    %2135 = vmatmul.f32.gmra.mxu0 %v1574
    %v2136 = vpop.f32.mrf.mxu0
    %v2137 = vadd.f32 %v2072, %v2136
    %2138 = vmatmul.f32.gmra.mxu0 %v1575
    %v2139 = vpop.f32.mrf.mxu0
    %v2140 = vadd.f32 %v2075, %v2139
    %2141 = vmatmul.f32.gmra.mxu0 %v1576
    %v2142 = vpop.f32.mrf.mxu0
    %v2143 = vadd.f32 %v2078, %v2142
    %2144 = vmatmul.f32.gmra.mxu0 %v1577
    %v2145 = vpop.f32.mrf.mxu0
    %v2146 = vadd.f32 %v2081, %v2145
    %2147 = vmatmul.f32.gmra.mxu0 %v1578
    %v2148 = vpop.f32.mrf.mxu0
    %v2149 = vadd.f32 %v2084, %v2148
    %2150 = vmatmul.f32.gmra.mxu0 %v1579
    %v2151 = vpop.f32.mrf.mxu0
    %v2152 = vadd.f32 %v2087, %v2151
    %2153 = vmatmul.f32.gmra.mxu0 %v1580
    %v2154 = vpop.f32.mrf.mxu0
    %v2155 = vadd.f32 %v2090, %v2154
    %2156 = vmatmul.f32.gmra.mxu0 %v1581
    %v2157 = vpop.f32.mrf.mxu0
    %v2158 = vadd.f32 %v2093, %v2157
    %2159 = vmatmul.f32.gmra.mxu0 %v1582
    %v2160 = vpop.f32.mrf.mxu0
    %v2161 = vadd.f32 %v2096, %v2160
    %2162 = vmatmul.f32.gmra.mxu0 %v1583
    %v2163 = vpop.f32.mrf.mxu0
    %v2164 = vadd.f32 %v2099, %v2163
    %2165 = vmatmul.f32.gmra.mxu0 %v1584
    %v2166 = vpop.f32.mrf.mxu0
    %v2167 = vadd.f32 %v2102, %v2166
    %2168 = vmatmul.f32.gmra.mxu0 %v1585
    %v2169 = vpop.f32.mrf.mxu0
    %v2170 = vadd.f32 %v2105, %v2169
    %2171 = vdwg.mxu0
    %2172 = vmatpush.msra.mxu0 %v1745
    %2173 = vmatpush.msra.mxu0 %v1744
    %2174 = vmatpush.msra.mxu0 %v1743
    %2175 = vmatpush.msra.mxu0 %v1742
    %2176 = vmatpush.msra.mxu0 %v1741
    %2177 = vmatpush.msra.mxu0 %v1740
    %2178 = vmatpush.msra.mxu0 %v1739
    %2179 = vmatpush.msra.mxu0 %v1738
    %2180 = vmatpush.msra.mxu0 %v1737
    %2181 = vmatpush.msra.mxu0 %v1736
    %2182 = vmatpush.msra.mxu0 %v1735
    %2183 = vmatpush.msra.mxu0 %v1734
    %2184 = vmatpush.msra.mxu0 %v1733
    %2185 = vmatpush.msra.mxu0 %v1732
    %2186 = vmatpush.msra.mxu0 %v1731
    %2187 = vmatpush.msra.mxu0 %v1730
    %2188 = vmatmul.f32.gmra.mxu0 %v1586
    %v2189 = vpop.f32.mrf.mxu0
    %v2190 = vadd.f32 %v2125, %v2189
    %2191 = vmatmul.f32.gmra.mxu0 %v1587
    %v2192 = vpop.f32.mrf.mxu0
    %v2193 = vadd.f32 %v2128, %v2192
    %2194 = vmatmul.f32.gmra.mxu0 %v1588
    %v2195 = vpop.f32.mrf.mxu0
    %v2196 = vadd.f32 %v2131, %v2195
    %2197 = vmatmul.f32.gmra.mxu0 %v1589
    %v2198 = vpop.f32.mrf.mxu0
    %v2199 = vadd.f32 %v2134, %v2198
    %2200 = vmatmul.f32.gmra.mxu0 %v1590
    %v2201 = vpop.f32.mrf.mxu0
    %v2202 = vadd.f32 %v2137, %v2201
    %2203 = vmatmul.f32.gmra.mxu0 %v1591
    %v2204 = vpop.f32.mrf.mxu0
    %v2205 = vadd.f32 %v2140, %v2204
    %2206 = vmatmul.f32.gmra.mxu0 %v1592
    %v2207 = vpop.f32.mrf.mxu0
    %v2208 = vadd.f32 %v2143, %v2207
    %2209 = vmatmul.f32.gmra.mxu0 %v1593
    %v2210 = vpop.f32.mrf.mxu0
    %v2211 = vadd.f32 %v2146, %v2210
    %2212 = vmatmul.f32.gmra.mxu0 %v1594
    %v2213 = vpop.f32.mrf.mxu0
    %v2214 = vadd.f32 %v2149, %v2213
    %2215 = vmatmul.f32.gmra.mxu0 %v1595
    %v2216 = vpop.f32.mrf.mxu0
    %v2217 = vadd.f32 %v2152, %v2216
    %2218 = vmatmul.f32.gmra.mxu0 %v1596
    %v2219 = vpop.f32.mrf.mxu0
    %v2220 = vadd.f32 %v2155, %v2219
    %2221 = vmatmul.f32.gmra.mxu0 %v1597
    %v2222 = vpop.f32.mrf.mxu0
    %v2223 = vadd.f32 %v2158, %v2222
    %2224 = vmatmul.f32.gmra.mxu0 %v1598
    %v2225 = vpop.f32.mrf.mxu0
    %v2226 = vadd.f32 %v2161, %v2225
    %2227 = vmatmul.f32.gmra.mxu0 %v1599
    %v2228 = vpop.f32.mrf.mxu0
    %v2229 = vadd.f32 %v2164, %v2228
    %2230 = vmatmul.f32.gmra.mxu0 %v1600
    %v2231 = vpop.f32.mrf.mxu0
    %v2232 = vadd.f32 %v2167, %v2231
    %2233 = vmatmul.f32.gmra.mxu0 %v1601
    %v2234 = vpop.f32.mrf.mxu0
    %v2235 = vadd.f32 %v2170, %v2234
    %2236 = vdwg.mxu0
    %2237 = vmatpush.msra.mxu0 %v1761
    %2238 = vmatpush.msra.mxu0 %v1760
    %2239 = vmatpush.msra.mxu0 %v1759
    %2240 = vmatpush.msra.mxu0 %v1758
    %2241 = vmatpush.msra.mxu0 %v1757
    %2242 = vmatpush.msra.mxu0 %v1756
    %2243 = vmatpush.msra.mxu0 %v1755
    %2244 = vmatpush.msra.mxu0 %v1754
    %2245 = vmatpush.msra.mxu0 %v1753
    %2246 = vmatpush.msra.mxu0 %v1752
    %2247 = vmatpush.msra.mxu0 %v1751
    %2248 = vmatpush.msra.mxu0 %v1750
    %2249 = vmatpush.msra.mxu0 %v1749
    %2250 = vmatpush.msra.mxu0 %v1748
    %2251 = vmatpush.msra.mxu0 %v1747
    %2252 = vmatpush.msra.mxu0 %v1746
    %2253 = vmatmul.f32.gmra.mxu0 %v1602
    %v2254 = vpop.f32.mrf.mxu0
    %v2255 = vadd.f32 %v2190, %v2254
    %2256 = vmatmul.f32.gmra.mxu0 %v1603
    %v2257 = vpop.f32.mrf.mxu0
    %v2258 = vadd.f32 %v2193, %v2257
    %2259 = vmatmul.f32.gmra.mxu0 %v1604
    %v2260 = vpop.f32.mrf.mxu0
    %v2261 = vadd.f32 %v2196, %v2260
    %2262 = vmatmul.f32.gmra.mxu0 %v1605
    %v2263 = vpop.f32.mrf.mxu0
    %v2264 = vadd.f32 %v2199, %v2263
    %2265 = vmatmul.f32.gmra.mxu0 %v1606
    %v2266 = vpop.f32.mrf.mxu0
    %v2267 = vadd.f32 %v2202, %v2266
    %2268 = vmatmul.f32.gmra.mxu0 %v1607
    %v2269 = vpop.f32.mrf.mxu0
    %v2270 = vadd.f32 %v2205, %v2269
    %2271 = vmatmul.f32.gmra.mxu0 %v1608
    %v2272 = vpop.f32.mrf.mxu0
    %v2273 = vadd.f32 %v2208, %v2272
    %2274 = vmatmul.f32.gmra.mxu0 %v1609
    %v2275 = vpop.f32.mrf.mxu0
    %v2276 = vadd.f32 %v2211, %v2275
    %2277 = vmatmul.f32.gmra.mxu0 %v1610
    %v2278 = vpop.f32.mrf.mxu0
    %v2279 = vadd.f32 %v2214, %v2278
    %2280 = vmatmul.f32.gmra.mxu0 %v1611
    %v2281 = vpop.f32.mrf.mxu0
    %v2282 = vadd.f32 %v2217, %v2281
    %2283 = vmatmul.f32.gmra.mxu0 %v1612
    %v2284 = vpop.f32.mrf.mxu0
    %v2285 = vadd.f32 %v2220, %v2284
    %2286 = vmatmul.f32.gmra.mxu0 %v1613
    %v2287 = vpop.f32.mrf.mxu0
    %v2288 = vadd.f32 %v2223, %v2287
    %2289 = vmatmul.f32.gmra.mxu0 %v1614
    %v2290 = vpop.f32.mrf.mxu0
    %v2291 = vadd.f32 %v2226, %v2290
    %2292 = vmatmul.f32.gmra.mxu0 %v1615
    %v2293 = vpop.f32.mrf.mxu0
    %v2294 = vadd.f32 %v2229, %v2293
    %2295 = vmatmul.f32.gmra.mxu0 %v1616
    %v2296 = vpop.f32.mrf.mxu0
    %v2297 = vadd.f32 %v2232, %v2296
    %2298 = vmatmul.f32.gmra.mxu0 %v1617
    %v2299 = vpop.f32.mrf.mxu0
    %v2300 = vadd.f32 %v2235, %v2299
    %2301 = vdwg.mxu0
    %2302 = vmatpush.msra.mxu0 %v1777
    %2303 = vmatpush.msra.mxu0 %v1776
    %2304 = vmatpush.msra.mxu0 %v1775
    %2305 = vmatpush.msra.mxu0 %v1774
    %2306 = vmatpush.msra.mxu0 %v1773
    %2307 = vmatpush.msra.mxu0 %v1772
    %2308 = vmatpush.msra.mxu0 %v1771
    %2309 = vmatpush.msra.mxu0 %v1770
    %2310 = vmatpush.msra.mxu0 %v1769
    %2311 = vmatpush.msra.mxu0 %v1768
    %2312 = vmatpush.msra.mxu0 %v1767
    %2313 = vmatpush.msra.mxu0 %v1766
    %2314 = vmatpush.msra.mxu0 %v1765
    %2315 = vmatpush.msra.mxu0 %v1764
    %2316 = vmatpush.msra.mxu0 %v1763
    %2317 = vmatpush.msra.mxu0 %v1762
    %2318 = vmatmul.f32.gmra.mxu0 %v1618
    %v2319 = vpop.f32.mrf.mxu0
    %v2320 = vadd.f32 %v2255, %v2319
    %2321 = vmatmul.f32.gmra.mxu0 %v1619
    %v2322 = vpop.f32.mrf.mxu0
    %v2323 = vadd.f32 %v2258, %v2322
    %2324 = vmatmul.f32.gmra.mxu0 %v1620
    %v2325 = vpop.f32.mrf.mxu0
    %v2326 = vadd.f32 %v2261, %v2325
    %2327 = vmatmul.f32.gmra.mxu0 %v1621
    %v2328 = vpop.f32.mrf.mxu0
    %v2329 = vadd.f32 %v2264, %v2328
    %2330 = vmatmul.f32.gmra.mxu0 %v1622
    %v2331 = vpop.f32.mrf.mxu0
    %v2332 = vadd.f32 %v2267, %v2331
    %2333 = vmatmul.f32.gmra.mxu0 %v1623
    %v2334 = vpop.f32.mrf.mxu0
    %v2335 = vadd.f32 %v2270, %v2334
    %2336 = vmatmul.f32.gmra.mxu0 %v1624
    %v2337 = vpop.f32.mrf.mxu0
    %v2338 = vadd.f32 %v2273, %v2337
    %2339 = vmatmul.f32.gmra.mxu0 %v1625
    %v2340 = vpop.f32.mrf.mxu0
    %v2341 = vadd.f32 %v2276, %v2340
    %2342 = vmatmul.f32.gmra.mxu0 %v1626
    %v2343 = vpop.f32.mrf.mxu0
    %v2344 = vadd.f32 %v2279, %v2343
    %2345 = vmatmul.f32.gmra.mxu0 %v1627
    %v2346 = vpop.f32.mrf.mxu0
    %v2347 = vadd.f32 %v2282, %v2346
    %2348 = vmatmul.f32.gmra.mxu0 %v1628
    %v2349 = vpop.f32.mrf.mxu0
    %v2350 = vadd.f32 %v2285, %v2349
    %2351 = vmatmul.f32.gmra.mxu0 %v1629
    %v2352 = vpop.f32.mrf.mxu0
    %v2353 = vadd.f32 %v2288, %v2352
    %2354 = vmatmul.f32.gmra.mxu0 %v1630
    %v2355 = vpop.f32.mrf.mxu0
    %v2356 = vadd.f32 %v2291, %v2355
    %2357 = vmatmul.f32.gmra.mxu0 %v1631
    %v2358 = vpop.f32.mrf.mxu0
    %v2359 = vadd.f32 %v2294, %v2358
    %2360 = vmatmul.f32.gmra.mxu0 %v1632
    %v2361 = vpop.f32.mrf.mxu0
    %v2362 = vadd.f32 %v2297, %v2361
    %2363 = vmatmul.f32.gmra.mxu0 %v1633
    %v2364 = vpop.f32.mrf.mxu0
    %v2365 = vadd.f32 %v2300, %v2364
    %2366 = vdwg.mxu0
    %v2367 = vmax.f32 %v2320, 0.0
    %v2368 = vmax.f32 %v2323, 0.0
    %v2369 = vmax.f32 %v2326, 0.0
    %v2370 = vmax.f32 %v2329, 0.0
    %v2371 = vmax.f32 %v2332, 0.0
    %v2372 = vmax.f32 %v2335, 0.0
    %v2373 = vmax.f32 %v2338, 0.0
    %v2374 = vmax.f32 %v2341, 0.0
    %v2375 = vmax.f32 %v2344, 0.0
    %v2376 = vmax.f32 %v2347, 0.0
    %v2377 = vmax.f32 %v2350, 0.0
    %v2378 = vmax.f32 %v2353, 0.0
    %v2379 = vmax.f32 %v2356, 0.0
    %v2380 = vmax.f32 %v2359, 0.0
    %v2381 = vmax.f32 %v2362, 0.0
    %v2382 = vmax.f32 %v2365, 0.0
    %2383 = vst [vmem:[#allocation9] sm:$0xff] %v2367
    %2384 = vst [vmem:[#allocation9 + $0x8] sm:$0xff] %v2368
    %2385 = vst [vmem:[#allocation9 + $0x10] sm:$0xff] %v2369
    %2386 = vst [vmem:[#allocation9 + $0x18] sm:$0xff] %v2370
    %2387 = vst [vmem:[#allocation9 + $0x20] sm:$0xff] %v2371
    %2388 = vst [vmem:[#allocation9 + $0x28] sm:$0xff] %v2372
    %2389 = vst [vmem:[#allocation9 + $0x30] sm:$0xff] %v2373
    %2390 = vst [vmem:[#allocation9 + $0x38] sm:$0xff] %v2374
    %2391 = vst [vmem:[#allocation9 + $0x40] sm:$0xff] %v2375
    %2392 = vst [vmem:[#allocation9 + $0x48] sm:$0xff] %v2376
    %2393 = vst [vmem:[#allocation9 + $0x50] sm:$0xff] %v2377
    %2394 = vst [vmem:[#allocation9 + $0x58] sm:$0xff] %v2378
    %2395 = vst [vmem:[#allocation9 + $0x60] sm:$0xff] %v2379
    %2396 = vst [vmem:[#allocation9 + $0x68] sm:$0xff] %v2380
    %2397 = vst [vmem:[#allocation9 + $0x70] sm:$0xff] %v2381
    %2398 = vst [vmem:[#allocation9 + $0x78] sm:$0xff] %v2382
    // Predicated region
    $region34: #{tpu_custom_call.1} parent=1 // pred_check
      _
    $region35: #{tpu_custom_call.1} parent=1 // pred_check_branch
      %2400 = sbr.rel (0) target = $region37
    $region36: #{tpu_custom_call.1} parent=1 // pred_region
      %2402 = vsyncadd [#allocation5], 0
      %s2403 = sshll.u32 [#allocation9], 4
      %s2404 = int_to_ptr.vmem [resolvable:$true] %s2403
      %s2405 = sshll.u32 %s5, 4
      %s2406 = int_to_ptr.hbm [resolvable:$true] %s2405
      %2411 = dma.vmem_to_hbm [thread:$0]  %s2404, 2048, %s2406, [#allocation5], 128, 128, 8
    $region37: #{tpu_custom_call.1} parent=1 // pred_fallthru
      _
    // Predicated region
    $region38: #{tpu_custom_call.1} parent=1 // pred_check
      _
    $region39: #{tpu_custom_call.1} parent=1 // pred_check_branch
      %2413 = sbr.rel (0) target = $region41
    $region40: #{tpu_custom_call.1} parent=1 // pred_region
      %2415 = dma.done [#allocation5], 2048
    $region41: #{tpu_custom_call.1} parent=1 // pred_fallthru
      _
    %2416 = vsyncpa [#allocation4], 1
    %2417 = vsyncpa [#allocation7], 1
    %2418 = vsyncpa [#allocation5], 1

</llo_original>
